<compile_context>
chip_gen: v7x
topology: tpu7x:2x2x1
jax: 0.10.0
libtpu: 0.0.40
codegen_flags: <defaults>
</compile_context>

<pallas_src>
import math

import jax
import jax.numpy as jnp
from jax.experimental import pallas as pl
from jax.experimental.pallas import tpu as pltpu  # noqa: F401  (TPU backend)


def _decoder_rollout_kernel(pre_ref, gx_ref, term_ref, avail_ref,
                            h0_ref, c0_ref, whh_ref, wq_ref, rows_ref,
                            out_ref, h_ref, c_ref):
    """Single-invocation kernel: the whole T-step decode loop runs in here.

    pre_ref  : (T, B, N, H)  project_ref(static) + project_d/b(dynamic) + biases (precomputed)
    gx_ref   : (T, B, 4H)    decoder_input @ W_ih^T (precomputed)
    term_ref : (T, B, 1)     terminated flags
    avail_ref: (T, B, N)     availability mask
    h0/c0    : (B, H)        initial LSTM state
    whh_ref  : (H, 4H)       W_hh^T
    wq_ref   : (H, H)        project_query weight^T
    rows_ref : (2, H)        [b_q ; v]
    out_ref  : (T, B, OUT_W) packed lane-dense outputs [logits(N) | probs(N) | logp | action]
    h_ref/c_ref : (B, H)     final LSTM state
    """
    T, B, N, H = pre_ref.shape

    whh = whh_ref[...]
    wq = wq_ref[...]
    b_q = rows_ref[0:1, :]                   # (1, H)
    v_row = rows_ref[1:2, :]                 # (1, H)

    # Zero the packed output slab once (pad lanes stay deterministic).
    out_ref[...] = jnp.zeros(out_ref.shape, out_ref.dtype)

    # h/c carried as values (registers) across the unrolled loop.
    h = h0_ref[...]
    c = c0_ref[...]

    # T is small & static: fully unrolled Python loop.
    for t in range(T):
        # ---- LSTM step (num_layers=1, bias=False); x-part precomputed ----
        gates = gx_ref[t] + jnp.dot(h, whh, preferred_element_type=jnp.float32)  # (B, 4H)
        sg = jax.nn.sigmoid(gates)           # full-width EUP passes, then lane-slice
        th = jnp.tanh(gates)
        i_g = sg[:, 0 * H:1 * H]
        f_g = sg[:, 1 * H:2 * H]
        g_g = th[:, 2 * H:3 * H]
        o_g = sg[:, 3 * H:4 * H]
        c = f_g * c + i_g * g_g
        h = o_g * jnp.tanh(c)                # dropout = eval no-op

        # ---- attention: only project_query depends on the step ----
        q = jnp.dot(h, wq, preferred_element_type=jnp.float32) + b_q             # (B, H)
        t_act = jnp.tanh(pre_ref[t] + q[:, None, :])                              # (B, N, H)
        u = jnp.sum(t_act * v_row, axis=-1)                                       # (B, N) raw logits

        # ---- Actor tail: mask, log-softmax, greedy action, logp ----
        avail = avail_ref[t]                                                      # (B, N)
        masked = jnp.where(avail != 0.0, u, jnp.float32(-100000.0))
        m = jnp.max(masked, axis=1, keepdims=True)
        z = masked - m
        lse = jnp.log(jnp.sum(jnp.exp(z), axis=1, keepdims=True))
        logprobs = z - lse
        probs = jnp.exp(logprobs)
        iota = jax.lax.broadcasted_iota(jnp.int32, (B, N), 1)
        # first index attaining the max (torch.max tie-breaking); exact float equality
        # is safe because m is the max of the same values.
        action = jnp.min(jnp.where(masked == m, iota, N), axis=1, keepdims=True)  # (B, 1)
        logp = jnp.max(logprobs, axis=1, keepdims=True) * (1.0 - term_ref[t])     # (B, 1)

        # packed, lane-dense output slab (single HBM writeback at kernel end)
        out_ref[t, :, 0:N] = u
        out_ref[t, :, N:2 * N] = probs
        out_ref[t, :, 2 * N:2 * N + 1] = logp
        out_ref[t, :, 2 * N + 1:2 * N + 2] = action.astype(jnp.float32)

    h_ref[...] = h
    c_ref[...] = c


@jax.jit
def decoder_rollout(params, static_hidden, dynamic_seq, decoder_input_seq,
                    last_hh, terminated_seq, avail_seq):
    """Run T fused Decoder/Actor steps in a single pallas_call (single grid point).

    static_hidden     : (B, H, N)     encoder output, constant across steps
    dynamic_seq       : (T, B, N, 1)  per-step dynamic features
    decoder_input_seq : (T, B, H, 1)  per-step decoder inputs
    last_hh           : ((1,B,H), (1,B,H)) initial LSTM state
    terminated_seq    : (T, B)
    avail_seq         : (T, B, N)
    T == 1 reproduces a single Decoder.forward call.
    """
    B, H, N = static_hidden.shape
    T = dynamic_seq.shape[0]
    assert B == 2, "Attention unpacks the dynamic encoding along batch; B must be 2"
    f32 = jnp.float32

    # ---- parameter packing (natural PyTorch layouts -> lane-dense, pre-transposed) ----
    w_ih_T = params['w_ih'].T.astype(f32)        # (H, 4H)
    w_hh_T = params['w_hh'].T.astype(f32)        # (H, 4H)
    w_q_T = params['w_q'].T.astype(f32)          # (H, H)
    w_r_T = params['w_ref'].T.astype(f32)        # (H, H)
    w_d_T = params['w_d'].T.astype(f32)          # (H, H)
    w_b_T = params['w_b'].T.astype(f32)          # (H, H)
    w_enc = params['w_enc'].astype(f32)          # (1, H)  Conv1d(1,H,1) weight
    b_enc = params['b_enc'].astype(f32)          # (1, H)  Conv1d(1,H,1) bias

    # ---- loop-invariant precompute (traced once, fused by XLA; blessed by review) ----
    # Conv1d(1,H,1) dynamic encoder folded exactly through project_d / project_b.
    wd_eff = w_enc @ w_d_T                                                        # (1, H)
    wb_eff = w_enc @ w_b_T                                                        # (1, H)
    b_att = b_enc @ (w_d_T + w_b_T) + params['b_d'].astype(f32) + params['b_b'].astype(f32)

    # project_ref(static): loop-invariant, hoisted (computed once, not T times).
    static_nh = jnp.transpose(static_hidden.astype(f32), (0, 2, 1))               # (B, N, H)
    e = (static_nh.reshape(B * N, H) @ w_r_T + params['b_ref'].astype(f32)).reshape(B, N, H)

    # dynamic encoding + project_d/b for all steps (independent of the recurrence);
    # the (B,H,N) dynamic encoding is unpacked along batch (the hybrid_model quirk).
    dyn = dynamic_seq[..., 0].astype(f32)                                         # (T, B, N)
    d_ex = dyn[:, 0, :, None] * wd_eff + dyn[:, 1, :, None] * wb_eff + b_att      # (T, N, H)
    pre = e[None, :, :, :] + d_ex[:, None, :, :]                                  # (T, B, N, H)

    # x-part of the LSTM gates for all steps: one matmul instead of T tiny ones.
    x_seq = decoder_input_seq[..., 0].astype(f32)                                 # (T, B, H)
    gx = (x_seq.reshape(T * B, H) @ w_ih_T).reshape(T, B, 4 * H)

    h0 = last_hh[0][0].astype(f32)                                                # (B, H)
    c0 = last_hh[1][0].astype(f32)                                                # (B, H)
    term = terminated_seq.reshape(T, B, 1).astype(f32)
    avail = avail_seq.astype(f32)
    rows = jnp.concatenate([params['b_q'].astype(f32), params['v'].astype(f32)], axis=0)  # (2, H)

    out_w = max(128, ((2 * N + 2 + 127) // 128) * 128)   # lane-dense packed output width
    out_shapes = (
        jax.ShapeDtypeStruct((T, B, out_w), f32),   # packed [logits | probs | logp | action]
        jax.ShapeDtypeStruct((B, H), f32),          # final h
        jax.ShapeDtypeStruct((B, H), f32),          # final c
    )

    # No grid: every input/output is a full resident VMEM block, DMA'd exactly once;
    # the whole T-step loop runs inside one kernel invocation.
    slab, h_fin, c_fin = pl.pallas_call(
        _decoder_rollout_kernel,
        out_shape=out_shapes,
    )(pre, gx, term, avail, h0, c0, w_hh_T, w_q_T, rows)

    logits = slab[:, :, 0:N]                         # raw Decoder logits output
    probs = slab[:, :, N:2 * N]                      # masked softmax probs
    logp = slab[:, :, 2 * N]                         # log-prob of chosen action
    actions = slab[:, :, 2 * N + 1].astype(jnp.int32)  # greedy action (exact small ints)
    last_hh_out = (h_fin[None, :, :], c_fin[None, :, :])
    return logits, actions, probs, logp, last_hh_out


def init_params(key, H):
    """Parameters in their natural PyTorch layouts."""
    ks = jax.random.split(key, 13)

    def xavier(k, shape):
        fan_out, fan_in = shape[0], shape[1]
        bound = math.sqrt(6.0 / (fan_in + fan_out))
        return jax.random.uniform(k, shape, jnp.float32, -bound, bound)

    def bias(k, n, fan_in):
        bound = 1.0 / math.sqrt(fan_in)
        return jax.random.uniform(k, (1, n), jnp.float32, -bound, bound)

    p = {}
    p['w_enc'] = xavier(ks[0], (H, 1)).T          # Conv1d(1,H,1) weight, stored (1,H)
    p['b_enc'] = bias(ks[1], H, 1)                # (1,H)
    p['w_ih'] = xavier(ks[2], (4 * H, H))         # LSTM weight_ih (bias=False)
    p['w_hh'] = xavier(ks[3], (4 * H, H))         # LSTM weight_hh
    p['w_d'] = xavier(ks[4], (H, H));   p['b_d'] = bias(ks[5], H, H)     # project_d
    p['w_b'] = xavier(ks[6], (H, H));   p['b_b'] = bias(ks[7], H, H)     # project_b
    p['w_ref'] = xavier(ks[8], (H, H)); p['b_ref'] = bias(ks[9], H, H)   # project_ref
    p['w_q'] = xavier(ks[10], (H, H));  p['b_q'] = bias(ks[11], H, H)    # project_query
    p['v'] = xavier(ks[12], (1, H))               # attention v (1,1,H) -> (1,H)
    return p


if __name__ == "__main__":
    B, H, N, T = 2, 32, 8, 4     # B must be 2 (reference unpacks a tensor along batch)
    key = jax.random.PRNGKey(0)
    k_inp, k_par = jax.random.split(key)
    params = init_params(k_par, H)

    ks = jax.random.split(k_inp, 6)
    static_hidden = jax.random.normal(ks[0], (B, H, N), jnp.float32)
    dynamic_seq = jax.random.normal(ks[1], (T, B, N, 1), jnp.float32)
    decoder_input_seq = jax.random.normal(ks[2], (T, B, H, 1), jnp.float32)
    h0 = jax.random.normal(ks[3], (1, B, H), jnp.float32)
    c0 = jax.random.normal(ks[4], (1, B, H), jnp.float32)
    terminated_seq = jnp.zeros((T, B), jnp.float32)
    avail_seq = (jax.random.uniform(ks[5], (T, B, N)) > 0.3).astype(jnp.float32)
    avail_seq = avail_seq.at[..., 0].set(1.0)    # keep at least one action available

    logits, actions, probs, logps, last_hh = decoder_rollout(
        params, static_hidden, dynamic_seq, decoder_input_seq, (h0, c0),
        terminated_seq, avail_seq)
    jax.block_until_ready((logits, actions, probs, logps, last_hh))
    print("KERNEL_OK")
</pallas_src>

<mosaic_0001>
module attributes {stable_mosaic.version = 11 : i64} {
  func.func @_decoder_rollout_kernel(%arg0: memref<4x2x8x32xf32, #tpu.memory_space<vmem>>, %arg1: memref<4x2x128xf32, #tpu.memory_space<vmem>>, %arg2: memref<4x2x1xf32, #tpu.memory_space<vmem>>, %arg3: memref<4x2x8xf32, #tpu.memory_space<vmem>>, %arg4: memref<2x32xf32, #tpu.memory_space<vmem>>, %arg5: memref<2x32xf32, #tpu.memory_space<vmem>>, %arg6: memref<32x128xf32, #tpu.memory_space<vmem>>, %arg7: memref<32x32xf32, #tpu.memory_space<vmem>>, %arg8: memref<2x32xf32, #tpu.memory_space<vmem>>, %arg9: memref<4x2x128xf32, #tpu.memory_space<vmem>>, %arg10: memref<2x32xf32, #tpu.memory_space<vmem>>, %arg11: memref<2x32xf32, #tpu.memory_space<vmem>>) attributes {dimension_semantics = [], scalar_prefetch = 0 : i64, scratch_operands = 0 : i64, tpu.core_type = #tpu.core_type<tc>} {
    %c0 = arith.constant 0 : index
    %c0_0 = arith.constant 0 : index
    %0 = vector.load %arg6[%c0, %c0_0] : memref<32x128xf32, #tpu.memory_space<vmem>>, vector<32x128xf32>
    %c0_1 = arith.constant 0 : index
    %c0_2 = arith.constant 0 : index
    %1 = vector.load %arg7[%c0_1, %c0_2] : memref<32x32xf32, #tpu.memory_space<vmem>>, vector<32x32xf32>
    %c0_3 = arith.constant 0 : index
    %c0_4 = arith.constant 0 : index
    %2 = vector.load %arg8[%c0_3, %c0_4] : memref<2x32xf32, #tpu.memory_space<vmem>>, vector<1x32xf32>
    %c1 = arith.constant 1 : index
    %c0_5 = arith.constant 0 : index
    %3 = vector.load %arg8[%c1, %c0_5] : memref<2x32xf32, #tpu.memory_space<vmem>>, vector<1x32xf32>
    %cst = arith.constant 0.000000e+00 : f32
    %4 = vector.broadcast %cst : f32 to vector<4x2x128xf32>
    %c0_6 = arith.constant 0 : index
    %c0_7 = arith.constant 0 : index
    %c0_8 = arith.constant 0 : index
    %5 = vector.load %arg9[%c0_6, %c0_7, %c0_8] : memref<4x2x128xf32, #tpu.memory_space<vmem>>, vector<4x2x128xf32>
    tpu.vector_store %arg9[%c0_6, %c0_7, %c0_8], %4 {strides = array<i32>} : memref<4x2x128xf32, #tpu.memory_space<vmem>>, vector<4x2x128xf32>,
    %c0_9 = arith.constant 0 : index
    %c0_10 = arith.constant 0 : index
    %6 = vector.load %arg4[%c0_9, %c0_10] : memref<2x32xf32, #tpu.memory_space<vmem>>, vector<2x32xf32>
    %c0_11 = arith.constant 0 : index
    %c0_12 = arith.constant 0 : index
    %7 = vector.load %arg5[%c0_11, %c0_12] : memref<2x32xf32, #tpu.memory_space<vmem>>, vector<2x32xf32>
    %c0_13 = arith.constant 0 : index
    %c0_14 = arith.constant 0 : index
    %c0_15 = arith.constant 0 : index
    %8 = vector.load %arg1[%c0_13, %c0_14, %c0_15] : memref<4x2x128xf32, #tpu.memory_space<vmem>>, vector<1x2x128xf32>
    %9 = vector.shape_cast %8 : vector<1x2x128xf32> to vector<2x128xf32>
    %cst_16 = arith.constant dense<0.000000e+00> : vector<2x128xf32>
    %10 = tpu.matmul %6, %0, %cst_16 {dimension_numbers = #tpu.dot_dimension_numbers<[1], [0], [0], [1], [0, 0, 1, 1], [], []>} : vector<2x32xf32>, vector<32x128xf32>, vector<2x128xf32> -> vector<2x128xf32>
    %11 = arith.addf %9, %10 : vector<2x128xf32>
    %12 = arith.negf %11 : vector<2x128xf32>
    %13 = math.exp %12 : vector<2x128xf32>
    %cst_17 = arith.constant 1.000000e+00 : f32
    %14 = vector.broadcast %cst_17 : f32 to vector<2x128xf32>
    %15 = arith.addf %14, %13 : vector<2x128xf32>
    %16 = arith.divf %14, %15 : vector<2x128xf32>
    %17 = math.tanh %11 : vector<2x128xf32>
    %18 = vector.extract_strided_slice %16 {offsets = [0, 0], sizes = [2, 32], strides = [1, 1]} : vector<2x128xf32> to vector<2x32xf32>
    %19 = vector.extract_strided_slice %16 {offsets = [0, 32], sizes = [2, 32], strides = [1, 1]} : vector<2x128xf32> to vector<2x32xf32>
    %20 = vector.extract_strided_slice %17 {offsets = [0, 64], sizes = [2, 32], strides = [1, 1]} : vector<2x128xf32> to vector<2x32xf32>
    %21 = vector.extract_strided_slice %16 {offsets = [0, 96], sizes = [2, 32], strides = [1, 1]} : vector<2x128xf32> to vector<2x32xf32>
    %22 = arith.mulf %19, %7 : vector<2x32xf32>
    %23 = arith.mulf %18, %20 : vector<2x32xf32>
    %24 = arith.addf %22, %23 : vector<2x32xf32>
    %25 = math.tanh %24 : vector<2x32xf32>
    %26 = arith.mulf %21, %25 : vector<2x32xf32>
    %cst_18 = arith.constant dense<0.000000e+00> : vector<2x32xf32>
    %27 = tpu.matmul %26, %1, %cst_18 {dimension_numbers = #tpu.dot_dimension_numbers<[1], [0], [0], [1], [0, 0, 1, 1], [], []>} : vector<2x32xf32>, vector<32x32xf32>, vector<2x32xf32> -> vector<2x32xf32>
    %28 = vector.broadcast %2 : vector<1x32xf32> to vector<2x32xf32>
    %29 = arith.addf %27, %28 : vector<2x32xf32>
    %c0_19 = arith.constant 0 : index
    %c0_20 = arith.constant 0 : index
    %c0_21 = arith.constant 0 : index
    %c0_22 = arith.constant 0 : index
    %30 = vector.load %arg0[%c0_19, %c0_20, %c0_21, %c0_22] : memref<4x2x8x32xf32, #tpu.memory_space<vmem>>, vector<1x2x8x32xf32>
    %31 = vector.shape_cast %30 : vector<1x2x8x32xf32> to vector<2x8x32xf32>
    %32 = vector.shape_cast %29 : vector<2x32xf32> to vector<2x1x32xf32>
    %33 = vector.broadcast %32 : vector<2x1x32xf32> to vector<2x8x32xf32>
    %34 = arith.addf %31, %33 : vector<2x8x32xf32>
    %35 = math.tanh %34 : vector<2x8x32xf32>
    %36 = vector.shape_cast %3 : vector<1x32xf32> to vector<1x1x32xf32>
    %37 = vector.broadcast %36 : vector<1x1x32xf32> to vector<2x8x32xf32>
    %38 = arith.mulf %35, %37 : vector<2x8x32xf32>
    %cst_23 = arith.constant dense<0.000000e+00> : vector<2x8xf32>
    %39 = vector.multi_reduction <add>, %38, %cst_23 [2] : vector<2x8x32xf32> to vector<2x8xf32>
    %c0_24 = arith.constant 0 : index
    %c0_25 = arith.constant 0 : index
    %c0_26 = arith.constant 0 : index
    %40 = vector.load %arg3[%c0_24, %c0_25, %c0_26] : memref<4x2x8xf32, #tpu.memory_space<vmem>>, vector<1x2x8xf32>
    %41 = vector.shape_cast %40 : vector<1x2x8xf32> to vector<2x8xf32>
    %cst_27 = arith.constant 0.000000e+00 : f32
    %42 = vector.broadcast %cst_27 : f32 to vector<2x8xf32>
    %43 = arith.cmpf one, %41, %42 : vector<2x8xf32>
    %cst_28 = arith.constant -1.000000e+05 : f32
    %44 = vector.broadcast %cst_28 : f32 to vector<2x8xf32>
    %45 = arith.select %43, %39, %44 : vector<2x8xi1>, vector<2x8xf32>
    %cst_29 = arith.constant dense<0xFF800000> : vector<2xf32>
    %46 = vector.multi_reduction <maximumf>, %45, %cst_29 [1] : vector<2x8xf32> to vector<2xf32>
    %47 = vector.shape_cast %46 : vector<2xf32> to vector<2x1xf32>
    %48 = vector.broadcast %47 : vector<2x1xf32> to vector<2x8xf32>
    %49 = arith.subf %45, %48 : vector<2x8xf32>
    %50 = math.exp %49 : vector<2x8xf32>
    %cst_30 = arith.constant dense<0.000000e+00> : vector<2xf32>
    %51 = vector.multi_reduction <add>, %50, %cst_30 [1] : vector<2x8xf32> to vector<2xf32>
    %52 = vector.shape_cast %51 : vector<2xf32> to vector<2x1xf32>
    %53 = math.log %52 : vector<2x1xf32>
    %54 = vector.broadcast %53 : vector<2x1xf32> to vector<2x8xf32>
    %55 = arith.subf %49, %54 : vector<2x8xf32>
    %56 = math.exp %55 : vector<2x8xf32>
    %57 = tpu.iota {dimensions = array<i32: 1>} : vector<2x8xi32>
    %58 = vector.broadcast %47 : vector<2x1xf32> to vector<2x8xf32>
    %59 = arith.cmpf oeq, %45, %58 : vector<2x8xf32>
    %c8_i32 = arith.constant 8 : i32
    %60 = vector.broadcast %c8_i32 : i32 to vector<2x8xi32>
    %61 = arith.select %59, %57, %60 : vector<2x8xi1>, vector<2x8xi32>
    %cst_31 = arith.constant dense<2147483647> : vector<2xi32>
    %62 = vector.multi_reduction <minsi>, %61, %cst_31 [1] : vector<2x8xi32> to vector<2xi32>
    %63 = vector.shape_cast %62 : vector<2xi32> to vector<2x1xi32>
    %cst_32 = arith.constant dense<0xFF800000> : vector<2xf32>
    %64 = vector.multi_reduction <maximumf>, %55, %cst_32 [1] : vector<2x8xf32> to vector<2xf32>
    %65 = vector.shape_cast %64 : vector<2xf32> to vector<2x1xf32>
    %c0_33 = arith.constant 0 : index
    %c0_34 = arith.constant 0 : index
    %c0_35 = arith.constant 0 : index
    %66 = vector.load %arg2[%c0_33, %c0_34, %c0_35] : memref<4x2x1xf32, #tpu.memory_space<vmem>>, vector<1x2x1xf32>
    %67 = vector.shape_cast %66 : vector<1x2x1xf32> to vector<2x1xf32>
    %cst_36 = arith.constant 1.000000e+00 : f32
    %68 = vector.broadcast %cst_36 : f32 to vector<2x1xf32>
    %69 = arith.subf %68, %67 : vector<2x1xf32>
    %70 = arith.mulf %65, %69 : vector<2x1xf32>
    %c0_37 = arith.constant 0 : index
    %c0_38 = arith.constant 0 : index
    %c0_39 = arith.constant 0 : index
    %71 = vector.load %arg9[%c0_37, %c0_38, %c0_39] : memref<4x2x128xf32, #tpu.memory_space<vmem>>, vector<1x2x8xf32>
    %72 = vector.shape_cast %71 : vector<1x2x8xf32> to vector<2x8xf32>
    %73 = vector.shape_cast %39 : vector<2x8xf32> to vector<1x2x8xf32>
    tpu.vector_store %arg9[%c0_37, %c0_38, %c0_39], %73 {strides = array<i32>} : memref<4x2x128xf32, #tpu.memory_space<vmem>>, vector<1x2x8xf32>,
    %c0_40 = arith.constant 0 : index
    %c0_41 = arith.constant 0 : index
    %c8 = arith.constant 8 : index
    %74 = vector.load %arg9[%c0_40, %c0_41, %c8] : memref<4x2x128xf32, #tpu.memory_space<vmem>>, vector<1x2x8xf32>
    %75 = vector.shape_cast %74 : vector<1x2x8xf32> to vector<2x8xf32>
    %76 = vector.shape_cast %56 : vector<2x8xf32> to vector<1x2x8xf32>
    tpu.vector_store %arg9[%c0_40, %c0_41, %c8], %76 {strides = array<i32>} : memref<4x2x128xf32, #tpu.memory_space<vmem>>, vector<1x2x8xf32>,
    %c0_42 = arith.constant 0 : index
    %c0_43 = arith.constant 0 : index
    %c16 = arith.constant 16 : index
    %77 = vector.load %arg9[%c0_42, %c0_43, %c16] : memref<4x2x128xf32, #tpu.memory_space<vmem>>, vector<1x2x1xf32>
    %78 = vector.shape_cast %77 : vector<1x2x1xf32> to vector<2x1xf32>
    %79 = vector.shape_cast %70 : vector<2x1xf32> to vector<1x2x1xf32>
    tpu.vector_store %arg9[%c0_42, %c0_43, %c16], %79 {strides = array<i32>} : memref<4x2x128xf32, #tpu.memory_space<vmem>>, vector<1x2x1xf32>,
    %80 = arith.sitofp %63 : vector<2x1xi32> to vector<2x1xf32>
    %c0_44 = arith.constant 0 : index
    %c0_45 = arith.constant 0 : index
    %c17 = arith.constant 17 : index
    %81 = vector.load %arg9[%c0_44, %c0_45, %c17] : memref<4x2x128xf32, #tpu.memory_space<vmem>>, vector<1x2x1xf32>
    %82 = vector.shape_cast %81 : vector<1x2x1xf32> to vector<2x1xf32>
    %83 = vector.shape_cast %80 : vector<2x1xf32> to vector<1x2x1xf32>
    tpu.vector_store %arg9[%c0_44, %c0_45, %c17], %83 {strides = array<i32>} : memref<4x2x128xf32, #tpu.memory_space<vmem>>, vector<1x2x1xf32>,
    %c1_46 = arith.constant 1 : index
    %c0_47 = arith.constant 0 : index
    %c0_48 = arith.constant 0 : index
    %84 = vector.load %arg1[%c1_46, %c0_47, %c0_48] : memref<4x2x128xf32, #tpu.memory_space<vmem>>, vector<1x2x128xf32>
    %85 = vector.shape_cast %84 : vector<1x2x128xf32> to vector<2x128xf32>
    %cst_49 = arith.constant dense<0.000000e+00> : vector<2x128xf32>
    %86 = tpu.matmul %26, %0, %cst_49 {dimension_numbers = #tpu.dot_dimension_numbers<[1], [0], [0], [1], [0, 0, 1, 1], [], []>} : vector<2x32xf32>, vector<32x128xf32>, vector<2x128xf32> -> vector<2x128xf32>
    %87 = arith.addf %85, %86 : vector<2x128xf32>
    %88 = arith.negf %87 : vector<2x128xf32>
    %89 = math.exp %88 : vector<2x128xf32>
    %cst_50 = arith.constant 1.000000e+00 : f32
    %90 = vector.broadcast %cst_50 : f32 to vector<2x128xf32>
    %91 = arith.addf %90, %89 : vector<2x128xf32>
    %92 = arith.divf %90, %91 : vector<2x128xf32>
    %93 = math.tanh %87 : vector<2x128xf32>
    %94 = vector.extract_strided_slice %92 {offsets = [0, 0], sizes = [2, 32], strides = [1, 1]} : vector<2x128xf32> to vector<2x32xf32>
    %95 = vector.extract_strided_slice %92 {offsets = [0, 32], sizes = [2, 32], strides = [1, 1]} : vector<2x128xf32> to vector<2x32xf32>
    %96 = vector.extract_strided_slice %93 {offsets = [0, 64], sizes = [2, 32], strides = [1, 1]} : vector<2x128xf32> to vector<2x32xf32>
    %97 = vector.extract_strided_slice %92 {offsets = [0, 96], sizes = [2, 32], strides = [1, 1]} : vector<2x128xf32> to vector<2x32xf32>
    %98 = arith.mulf %95, %24 : vector<2x32xf32>
    %99 = arith.mulf %94, %96 : vector<2x32xf32>
    %100 = arith.addf %98, %99 : vector<2x32xf32>
    %101 = math.tanh %100 : vector<2x32xf32>
    %102 = arith.mulf %97, %101 : vector<2x32xf32>
    %cst_51 = arith.constant dense<0.000000e+00> : vector<2x32xf32>
    %103 = tpu.matmul %102, %1, %cst_51 {dimension_numbers = #tpu.dot_dimension_numbers<[1], [0], [0], [1], [0, 0, 1, 1], [], []>} : vector<2x32xf32>, vector<32x32xf32>, vector<2x32xf32> -> vector<2x32xf32>
    %104 = vector.broadcast %2 : vector<1x32xf32> to vector<2x32xf32>
    %105 = arith.addf %103, %104 : vector<2x32xf32>
    %c1_52 = arith.constant 1 : index
    %c0_53 = arith.constant 0 : index
    %c0_54 = arith.constant 0 : index
    %c0_55 = arith.constant 0 : index
    %106 = vector.load %arg0[%c1_52, %c0_53, %c0_54, %c0_55] : memref<4x2x8x32xf32, #tpu.memory_space<vmem>>, vector<1x2x8x32xf32>
    %107 = vector.shape_cast %106 : vector<1x2x8x32xf32> to vector<2x8x32xf32>
    %108 = vector.shape_cast %105 : vector<2x32xf32> to vector<2x1x32xf32>
    %109 = vector.broadcast %108 : vector<2x1x32xf32> to vector<2x8x32xf32>
    %110 = arith.addf %107, %109 : vector<2x8x32xf32>
    %111 = math.tanh %110 : vector<2x8x32xf32>
    %112 = vector.shape_cast %3 : vector<1x32xf32> to vector<1x1x32xf32>
    %113 = vector.broadcast %112 : vector<1x1x32xf32> to vector<2x8x32xf32>
    %114 = arith.mulf %111, %113 : vector<2x8x32xf32>
    %cst_56 = arith.constant dense<0.000000e+00> : vector<2x8xf32>
    %115 = vector.multi_reduction <add>, %114, %cst_56 [2] : vector<2x8x32xf32> to vector<2x8xf32>
    %c1_57 = arith.constant 1 : index
    %c0_58 = arith.constant 0 : index
    %c0_59 = arith.constant 0 : index
    %116 = vector.load %arg3[%c1_57, %c0_58, %c0_59] : memref<4x2x8xf32, #tpu.memory_space<vmem>>, vector<1x2x8xf32>
    %117 = vector.shape_cast %116 : vector<1x2x8xf32> to vector<2x8xf32>
    %cst_60 = arith.constant 0.000000e+00 : f32
    %118 = vector.broadcast %cst_60 : f32 to vector<2x8xf32>
    %119 = arith.cmpf one, %117, %118 : vector<2x8xf32>
    %cst_61 = arith.constant -1.000000e+05 : f32
    %120 = vector.broadcast %cst_61 : f32 to vector<2x8xf32>
    %121 = arith.select %119, %115, %120 : vector<2x8xi1>, vector<2x8xf32>
    %cst_62 = arith.constant dense<0xFF800000> : vector<2xf32>
    %122 = vector.multi_reduction <maximumf>, %121, %cst_62 [1] : vector<2x8xf32> to vector<2xf32>
    %123 = vector.shape_cast %122 : vector<2xf32> to vector<2x1xf32>
    %124 = vector.broadcast %123 : vector<2x1xf32> to vector<2x8xf32>
    %125 = arith.subf %121, %124 : vector<2x8xf32>
    %126 = math.exp %125 : vector<2x8xf32>
    %cst_63 = arith.constant dense<0.000000e+00> : vector<2xf32>
    %127 = vector.multi_reduction <add>, %126, %cst_63 [1] : vector<2x8xf32> to vector<2xf32>
    %128 = vector.shape_cast %127 : vector<2xf32> to vector<2x1xf32>
    %129 = math.log %128 : vector<2x1xf32>
    %130 = vector.broadcast %129 : vector<2x1xf32> to vector<2x8xf32>
    %131 = arith.subf %125, %130 : vector<2x8xf32>
    %132 = math.exp %131 : vector<2x8xf32>
    %133 = tpu.iota {dimensions = array<i32: 1>} : vector<2x8xi32>
    %134 = vector.broadcast %123 : vector<2x1xf32> to vector<2x8xf32>
    %135 = arith.cmpf oeq, %121, %134 : vector<2x8xf32>
    %c8_i32_64 = arith.constant 8 : i32
    %136 = vector.broadcast %c8_i32_64 : i32 to vector<2x8xi32>
    %137 = arith.select %135, %133, %136 : vector<2x8xi1>, vector<2x8xi32>
    %cst_65 = arith.constant dense<2147483647> : vector<2xi32>
    %138 = vector.multi_reduction <minsi>, %137, %cst_65 [1] : vector<2x8xi32> to vector<2xi32>
    %139 = vector.shape_cast %138 : vector<2xi32> to vector<2x1xi32>
    %cst_66 = arith.constant dense<0xFF800000> : vector<2xf32>
    %140 = vector.multi_reduction <maximumf>, %131, %cst_66 [1] : vector<2x8xf32> to vector<2xf32>
    %141 = vector.shape_cast %140 : vector<2xf32> to vector<2x1xf32>
    %c1_67 = arith.constant 1 : index
    %c0_68 = arith.constant 0 : index
    %c0_69 = arith.constant 0 : index
    %142 = vector.load %arg2[%c1_67, %c0_68, %c0_69] : memref<4x2x1xf32, #tpu.memory_space<vmem>>, vector<1x2x1xf32>
    %143 = vector.shape_cast %142 : vector<1x2x1xf32> to vector<2x1xf32>
    %cst_70 = arith.constant 1.000000e+00 : f32
    %144 = vector.broadcast %cst_70 : f32 to vector<2x1xf32>
    %145 = arith.subf %144, %143 : vector<2x1xf32>
    %146 = arith.mulf %141, %145 : vector<2x1xf32>
    %c1_71 = arith.constant 1 : index
    %c0_72 = arith.constant 0 : index
    %c0_73 = arith.constant 0 : index
    %147 = vector.load %arg9[%c1_71, %c0_72, %c0_73] : memref<4x2x128xf32, #tpu.memory_space<vmem>>, vector<1x2x8xf32>
    %148 = vector.shape_cast %147 : vector<1x2x8xf32> to vector<2x8xf32>
    %149 = vector.shape_cast %115 : vector<2x8xf32> to vector<1x2x8xf32>
    tpu.vector_store %arg9[%c1_71, %c0_72, %c0_73], %149 {strides = array<i32>} : memref<4x2x128xf32, #tpu.memory_space<vmem>>, vector<1x2x8xf32>,
    %c1_74 = arith.constant 1 : index
    %c0_75 = arith.constant 0 : index
    %c8_76 = arith.constant 8 : index
    %150 = vector.load %arg9[%c1_74, %c0_75, %c8_76] : memref<4x2x128xf32, #tpu.memory_space<vmem>>, vector<1x2x8xf32>
    %151 = vector.shape_cast %150 : vector<1x2x8xf32> to vector<2x8xf32>
    %152 = vector.shape_cast %132 : vector<2x8xf32> to vector<1x2x8xf32>
    tpu.vector_store %arg9[%c1_74, %c0_75, %c8_76], %152 {strides = array<i32>} : memref<4x2x128xf32, #tpu.memory_space<vmem>>, vector<1x2x8xf32>,
    %c1_77 = arith.constant 1 : index
    %c0_78 = arith.constant 0 : index
    %c16_79 = arith.constant 16 : index
    %153 = vector.load %arg9[%c1_77, %c0_78, %c16_79] : memref<4x2x128xf32, #tpu.memory_space<vmem>>, vector<1x2x1xf32>
    %154 = vector.shape_cast %153 : vector<1x2x1xf32> to vector<2x1xf32>
    %155 = vector.shape_cast %146 : vector<2x1xf32> to vector<1x2x1xf32>
    tpu.vector_store %arg9[%c1_77, %c0_78, %c16_79], %155 {strides = array<i32>} : memref<4x2x128xf32, #tpu.memory_space<vmem>>, vector<1x2x1xf32>,
    %156 = arith.sitofp %139 : vector<2x1xi32> to vector<2x1xf32>
    %c1_80 = arith.constant 1 : index
    %c0_81 = arith.constant 0 : index
    %c17_82 = arith.constant 17 : index
    %157 = vector.load %arg9[%c1_80, %c0_81, %c17_82] : memref<4x2x128xf32, #tpu.memory_space<vmem>>, vector<1x2x1xf32>
    %158 = vector.shape_cast %157 : vector<1x2x1xf32> to vector<2x1xf32>
    %159 = vector.shape_cast %156 : vector<2x1xf32> to vector<1x2x1xf32>
    tpu.vector_store %arg9[%c1_80, %c0_81, %c17_82], %159 {strides = array<i32>} : memref<4x2x128xf32, #tpu.memory_space<vmem>>, vector<1x2x1xf32>,
    %c2 = arith.constant 2 : index
    %c0_83 = arith.constant 0 : index
    %c0_84 = arith.constant 0 : index
    %160 = vector.load %arg1[%c2, %c0_83, %c0_84] : memref<4x2x128xf32, #tpu.memory_space<vmem>>, vector<1x2x128xf32>
    %161 = vector.shape_cast %160 : vector<1x2x128xf32> to vector<2x128xf32>
    %cst_85 = arith.constant dense<0.000000e+00> : vector<2x128xf32>
    %162 = tpu.matmul %102, %0, %cst_85 {dimension_numbers = #tpu.dot_dimension_numbers<[1], [0], [0], [1], [0, 0, 1, 1], [], []>} : vector<2x32xf32>, vector<32x128xf32>, vector<2x128xf32> -> vector<2x128xf32>
    %163 = arith.addf %161, %162 : vector<2x128xf32>
    %164 = arith.negf %163 : vector<2x128xf32>
    %165 = math.exp %164 : vector<2x128xf32>
    %cst_86 = arith.constant 1.000000e+00 : f32
    %166 = vector.broadcast %cst_86 : f32 to vector<2x128xf32>
    %167 = arith.addf %166, %165 : vector<2x128xf32>
    %168 = arith.divf %166, %167 : vector<2x128xf32>
    %169 = math.tanh %163 : vector<2x128xf32>
    %170 = vector.extract_strided_slice %168 {offsets = [0, 0], sizes = [2, 32], strides = [1, 1]} : vector<2x128xf32> to vector<2x32xf32>
    %171 = vector.extract_strided_slice %168 {offsets = [0, 32], sizes = [2, 32], strides = [1, 1]} : vector<2x128xf32> to vector<2x32xf32>
    %172 = vector.extract_strided_slice %169 {offsets = [0, 64], sizes = [2, 32], strides = [1, 1]} : vector<2x128xf32> to vector<2x32xf32>
    %173 = vector.extract_strided_slice %168 {offsets = [0, 96], sizes = [2, 32], strides = [1, 1]} : vector<2x128xf32> to vector<2x32xf32>
    %174 = arith.mulf %171, %100 : vector<2x32xf32>
    %175 = arith.mulf %170, %172 : vector<2x32xf32>
    %176 = arith.addf %174, %175 : vector<2x32xf32>
    %177 = math.tanh %176 : vector<2x32xf32>
    %178 = arith.mulf %173, %177 : vector<2x32xf32>
    %cst_87 = arith.constant dense<0.000000e+00> : vector<2x32xf32>
    %179 = tpu.matmul %178, %1, %cst_87 {dimension_numbers = #tpu.dot_dimension_numbers<[1], [0], [0], [1], [0, 0, 1, 1], [], []>} : vector<2x32xf32>, vector<32x32xf32>, vector<2x32xf32> -> vector<2x32xf32>
    %180 = vector.broadcast %2 : vector<1x32xf32> to vector<2x32xf32>
    %181 = arith.addf %179, %180 : vector<2x32xf32>
    %c2_88 = arith.constant 2 : index
    %c0_89 = arith.constant 0 : index
    %c0_90 = arith.constant 0 : index
    %c0_91 = arith.constant 0 : index
    %182 = vector.load %arg0[%c2_88, %c0_89, %c0_90, %c0_91] : memref<4x2x8x32xf32, #tpu.memory_space<vmem>>, vector<1x2x8x32xf32>
    %183 = vector.shape_cast %182 : vector<1x2x8x32xf32> to vector<2x8x32xf32>
    %184 = vector.shape_cast %181 : vector<2x32xf32> to vector<2x1x32xf32>
    %185 = vector.broadcast %184 : vector<2x1x32xf32> to vector<2x8x32xf32>
    %186 = arith.addf %183, %185 : vector<2x8x32xf32>
    %187 = math.tanh %186 : vector<2x8x32xf32>
    %188 = vector.shape_cast %3 : vector<1x32xf32> to vector<1x1x32xf32>
    %189 = vector.broadcast %188 : vector<1x1x32xf32> to vector<2x8x32xf32>
    %190 = arith.mulf %187, %189 : vector<2x8x32xf32>
    %cst_92 = arith.constant dense<0.000000e+00> : vector<2x8xf32>
    %191 = vector.multi_reduction <add>, %190, %cst_92 [2] : vector<2x8x32xf32> to vector<2x8xf32>
    %c2_93 = arith.constant 2 : index
    %c0_94 = arith.constant 0 : index
    %c0_95 = arith.constant 0 : index
    %192 = vector.load %arg3[%c2_93, %c0_94, %c0_95] : memref<4x2x8xf32, #tpu.memory_space<vmem>>, vector<1x2x8xf32>
    %193 = vector.shape_cast %192 : vector<1x2x8xf32> to vector<2x8xf32>
    %cst_96 = arith.constant 0.000000e+00 : f32
    %194 = vector.broadcast %cst_96 : f32 to vector<2x8xf32>
    %195 = arith.cmpf one, %193, %194 : vector<2x8xf32>
    %cst_97 = arith.constant -1.000000e+05 : f32
    %196 = vector.broadcast %cst_97 : f32 to vector<2x8xf32>
    %197 = arith.select %195, %191, %196 : vector<2x8xi1>, vector<2x8xf32>
    %cst_98 = arith.constant dense<0xFF800000> : vector<2xf32>
    %198 = vector.multi_reduction <maximumf>, %197, %cst_98 [1] : vector<2x8xf32> to vector<2xf32>
    %199 = vector.shape_cast %198 : vector<2xf32> to vector<2x1xf32>
    %200 = vector.broadcast %199 : vector<2x1xf32> to vector<2x8xf32>
    %201 = arith.subf %197, %200 : vector<2x8xf32>
    %202 = math.exp %201 : vector<2x8xf32>
    %cst_99 = arith.constant dense<0.000000e+00> : vector<2xf32>
    %203 = vector.multi_reduction <add>, %202, %cst_99 [1] : vector<2x8xf32> to vector<2xf32>
    %204 = vector.shape_cast %203 : vector<2xf32> to vector<2x1xf32>
    %205 = math.log %204 : vector<2x1xf32>
    %206 = vector.broadcast %205 : vector<2x1xf32> to vector<2x8xf32>
    %207 = arith.subf %201, %206 : vector<2x8xf32>
    %208 = math.exp %207 : vector<2x8xf32>
    %209 = tpu.iota {dimensions = array<i32: 1>} : vector<2x8xi32>
    %210 = vector.broadcast %199 : vector<2x1xf32> to vector<2x8xf32>
    %211 = arith.cmpf oeq, %197, %210 : vector<2x8xf32>
    %c8_i32_100 = arith.constant 8 : i32
    %212 = vector.broadcast %c8_i32_100 : i32 to vector<2x8xi32>
    %213 = arith.select %211, %209, %212 : vector<2x8xi1>, vector<2x8xi32>
    %cst_101 = arith.constant dense<2147483647> : vector<2xi32>
    %214 = vector.multi_reduction <minsi>, %213, %cst_101 [1] : vector<2x8xi32> to vector<2xi32>
    %215 = vector.shape_cast %214 : vector<2xi32> to vector<2x1xi32>
    %cst_102 = arith.constant dense<0xFF800000> : vector<2xf32>
    %216 = vector.multi_reduction <maximumf>, %207, %cst_102 [1] : vector<2x8xf32> to vector<2xf32>
    %217 = vector.shape_cast %216 : vector<2xf32> to vector<2x1xf32>
    %c2_103 = arith.constant 2 : index
    %c0_104 = arith.constant 0 : index
    %c0_105 = arith.constant 0 : index
    %218 = vector.load %arg2[%c2_103, %c0_104, %c0_105] : memref<4x2x1xf32, #tpu.memory_space<vmem>>, vector<1x2x1xf32>
    %219 = vector.shape_cast %218 : vector<1x2x1xf32> to vector<2x1xf32>
    %cst_106 = arith.constant 1.000000e+00 : f32
    %220 = vector.broadcast %cst_106 : f32 to vector<2x1xf32>
    %221 = arith.subf %220, %219 : vector<2x1xf32>
    %222 = arith.mulf %217, %221 : vector<2x1xf32>
    %c2_107 = arith.constant 2 : index
    %c0_108 = arith.constant 0 : index
    %c0_109 = arith.constant 0 : index
    %223 = vector.load %arg9[%c2_107, %c0_108, %c0_109] : memref<4x2x128xf32, #tpu.memory_space<vmem>>, vector<1x2x8xf32>
    %224 = vector.shape_cast %223 : vector<1x2x8xf32> to vector<2x8xf32>
    %225 = vector.shape_cast %191 : vector<2x8xf32> to vector<1x2x8xf32>
    tpu.vector_store %arg9[%c2_107, %c0_108, %c0_109], %225 {strides = array<i32>} : memref<4x2x128xf32, #tpu.memory_space<vmem>>, vector<1x2x8xf32>,
    %c2_110 = arith.constant 2 : index
    %c0_111 = arith.constant 0 : index
    %c8_112 = arith.constant 8 : index
    %226 = vector.load %arg9[%c2_110, %c0_111, %c8_112] : memref<4x2x128xf32, #tpu.memory_space<vmem>>, vector<1x2x8xf32>
    %227 = vector.shape_cast %226 : vector<1x2x8xf32> to vector<2x8xf32>
    %228 = vector.shape_cast %208 : vector<2x8xf32> to vector<1x2x8xf32>
    tpu.vector_store %arg9[%c2_110, %c0_111, %c8_112], %228 {strides = array<i32>} : memref<4x2x128xf32, #tpu.memory_space<vmem>>, vector<1x2x8xf32>,
    %c2_113 = arith.constant 2 : index
    %c0_114 = arith.constant 0 : index
    %c16_115 = arith.constant 16 : index
    %229 = vector.load %arg9[%c2_113, %c0_114, %c16_115] : memref<4x2x128xf32, #tpu.memory_space<vmem>>, vector<1x2x1xf32>
    %230 = vector.shape_cast %229 : vector<1x2x1xf32> to vector<2x1xf32>
    %231 = vector.shape_cast %222 : vector<2x1xf32> to vector<1x2x1xf32>
    tpu.vector_store %arg9[%c2_113, %c0_114, %c16_115], %231 {strides = array<i32>} : memref<4x2x128xf32, #tpu.memory_space<vmem>>, vector<1x2x1xf32>,
    %232 = arith.sitofp %215 : vector<2x1xi32> to vector<2x1xf32>
    %c2_116 = arith.constant 2 : index
    %c0_117 = arith.constant 0 : index
    %c17_118 = arith.constant 17 : index
    %233 = vector.load %arg9[%c2_116, %c0_117, %c17_118] : memref<4x2x128xf32, #tpu.memory_space<vmem>>, vector<1x2x1xf32>
    %234 = vector.shape_cast %233 : vector<1x2x1xf32> to vector<2x1xf32>
    %235 = vector.shape_cast %232 : vector<2x1xf32> to vector<1x2x1xf32>
    tpu.vector_store %arg9[%c2_116, %c0_117, %c17_118], %235 {strides = array<i32>} : memref<4x2x128xf32, #tpu.memory_space<vmem>>, vector<1x2x1xf32>,
    %c3 = arith.constant 3 : index
    %c0_119 = arith.constant 0 : index
    %c0_120 = arith.constant 0 : index
    %236 = vector.load %arg1[%c3, %c0_119, %c0_120] : memref<4x2x128xf32, #tpu.memory_space<vmem>>, vector<1x2x128xf32>
    %237 = vector.shape_cast %236 : vector<1x2x128xf32> to vector<2x128xf32>
    %cst_121 = arith.constant dense<0.000000e+00> : vector<2x128xf32>
    %238 = tpu.matmul %178, %0, %cst_121 {dimension_numbers = #tpu.dot_dimension_numbers<[1], [0], [0], [1], [0, 0, 1, 1], [], []>} : vector<2x32xf32>, vector<32x128xf32>, vector<2x128xf32> -> vector<2x128xf32>
    %239 = arith.addf %237, %238 : vector<2x128xf32>
    %240 = arith.negf %239 : vector<2x128xf32>
    %241 = math.exp %240 : vector<2x128xf32>
    %cst_122 = arith.constant 1.000000e+00 : f32
    %242 = vector.broadcast %cst_122 : f32 to vector<2x128xf32>
    %243 = arith.addf %242, %241 : vector<2x128xf32>
    %244 = arith.divf %242, %243 : vector<2x128xf32>
    %245 = math.tanh %239 : vector<2x128xf32>
    %246 = vector.extract_strided_slice %244 {offsets = [0, 0], sizes = [2, 32], strides = [1, 1]} : vector<2x128xf32> to vector<2x32xf32>
    %247 = vector.extract_strided_slice %244 {offsets = [0, 32], sizes = [2, 32], strides = [1, 1]} : vector<2x128xf32> to vector<2x32xf32>
    %248 = vector.extract_strided_slice %245 {offsets = [0, 64], sizes = [2, 32], strides = [1, 1]} : vector<2x128xf32> to vector<2x32xf32>
    %249 = vector.extract_strided_slice %244 {offsets = [0, 96], sizes = [2, 32], strides = [1, 1]} : vector<2x128xf32> to vector<2x32xf32>
    %250 = arith.mulf %247, %176 : vector<2x32xf32>
    %251 = arith.mulf %246, %248 : vector<2x32xf32>
    %252 = arith.addf %250, %251 : vector<2x32xf32>
    %253 = math.tanh %252 : vector<2x32xf32>
    %254 = arith.mulf %249, %253 : vector<2x32xf32>
    %cst_123 = arith.constant dense<0.000000e+00> : vector<2x32xf32>
    %255 = tpu.matmul %254, %1, %cst_123 {dimension_numbers = #tpu.dot_dimension_numbers<[1], [0], [0], [1], [0, 0, 1, 1], [], []>} : vector<2x32xf32>, vector<32x32xf32>, vector<2x32xf32> -> vector<2x32xf32>
    %256 = vector.broadcast %2 : vector<1x32xf32> to vector<2x32xf32>
    %257 = arith.addf %255, %256 : vector<2x32xf32>
    %c3_124 = arith.constant 3 : index
    %c0_125 = arith.constant 0 : index
    %c0_126 = arith.constant 0 : index
    %c0_127 = arith.constant 0 : index
    %258 = vector.load %arg0[%c3_124, %c0_125, %c0_126, %c0_127] : memref<4x2x8x32xf32, #tpu.memory_space<vmem>>, vector<1x2x8x32xf32>
    %259 = vector.shape_cast %258 : vector<1x2x8x32xf32> to vector<2x8x32xf32>
    %260 = vector.shape_cast %257 : vector<2x32xf32> to vector<2x1x32xf32>
    %261 = vector.broadcast %260 : vector<2x1x32xf32> to vector<2x8x32xf32>
    %262 = arith.addf %259, %261 : vector<2x8x32xf32>
    %263 = math.tanh %262 : vector<2x8x32xf32>
    %264 = vector.shape_cast %3 : vector<1x32xf32> to vector<1x1x32xf32>
    %265 = vector.broadcast %264 : vector<1x1x32xf32> to vector<2x8x32xf32>
    %266 = arith.mulf %263, %265 : vector<2x8x32xf32>
    %cst_128 = arith.constant dense<0.000000e+00> : vector<2x8xf32>
    %267 = vector.multi_reduction <add>, %266, %cst_128 [2] : vector<2x8x32xf32> to vector<2x8xf32>
    %c3_129 = arith.constant 3 : index
    %c0_130 = arith.constant 0 : index
    %c0_131 = arith.constant 0 : index
    %268 = vector.load %arg3[%c3_129, %c0_130, %c0_131] : memref<4x2x8xf32, #tpu.memory_space<vmem>>, vector<1x2x8xf32>
    %269 = vector.shape_cast %268 : vector<1x2x8xf32> to vector<2x8xf32>
    %cst_132 = arith.constant 0.000000e+00 : f32
    %270 = vector.broadcast %cst_132 : f32 to vector<2x8xf32>
    %271 = arith.cmpf one, %269, %270 : vector<2x8xf32>
    %cst_133 = arith.constant -1.000000e+05 : f32
    %272 = vector.broadcast %cst_133 : f32 to vector<2x8xf32>
    %273 = arith.select %271, %267, %272 : vector<2x8xi1>, vector<2x8xf32>
    %cst_134 = arith.constant dense<0xFF800000> : vector<2xf32>
    %274 = vector.multi_reduction <maximumf>, %273, %cst_134 [1] : vector<2x8xf32> to vector<2xf32>
    %275 = vector.shape_cast %274 : vector<2xf32> to vector<2x1xf32>
    %276 = vector.broadcast %275 : vector<2x1xf32> to vector<2x8xf32>
    %277 = arith.subf %273, %276 : vector<2x8xf32>
    %278 = math.exp %277 : vector<2x8xf32>
    %cst_135 = arith.constant dense<0.000000e+00> : vector<2xf32>
    %279 = vector.multi_reduction <add>, %278, %cst_135 [1] : vector<2x8xf32> to vector<2xf32>
    %280 = vector.shape_cast %279 : vector<2xf32> to vector<2x1xf32>
    %281 = math.log %280 : vector<2x1xf32>
    %282 = vector.broadcast %281 : vector<2x1xf32> to vector<2x8xf32>
    %283 = arith.subf %277, %282 : vector<2x8xf32>
    %284 = math.exp %283 : vector<2x8xf32>
    %285 = tpu.iota {dimensions = array<i32: 1>} : vector<2x8xi32>
    %286 = vector.broadcast %275 : vector<2x1xf32> to vector<2x8xf32>
    %287 = arith.cmpf oeq, %273, %286 : vector<2x8xf32>
    %c8_i32_136 = arith.constant 8 : i32
    %288 = vector.broadcast %c8_i32_136 : i32 to vector<2x8xi32>
    %289 = arith.select %287, %285, %288 : vector<2x8xi1>, vector<2x8xi32>
    %cst_137 = arith.constant dense<2147483647> : vector<2xi32>
    %290 = vector.multi_reduction <minsi>, %289, %cst_137 [1] : vector<2x8xi32> to vector<2xi32>
    %291 = vector.shape_cast %290 : vector<2xi32> to vector<2x1xi32>
    %cst_138 = arith.constant dense<0xFF800000> : vector<2xf32>
    %292 = vector.multi_reduction <maximumf>, %283, %cst_138 [1] : vector<2x8xf32> to vector<2xf32>
    %293 = vector.shape_cast %292 : vector<2xf32> to vector<2x1xf32>
    %c3_139 = arith.constant 3 : index
    %c0_140 = arith.constant 0 : index
    %c0_141 = arith.constant 0 : index
    %294 = vector.load %arg2[%c3_139, %c0_140, %c0_141] : memref<4x2x1xf32, #tpu.memory_space<vmem>>, vector<1x2x1xf32>
    %295 = vector.shape_cast %294 : vector<1x2x1xf32> to vector<2x1xf32>
    %cst_142 = arith.constant 1.000000e+00 : f32
    %296 = vector.broadcast %cst_142 : f32 to vector<2x1xf32>
    %297 = arith.subf %296, %295 : vector<2x1xf32>
    %298 = arith.mulf %293, %297 : vector<2x1xf32>
    %c3_143 = arith.constant 3 : index
    %c0_144 = arith.constant 0 : index
    %c0_145 = arith.constant 0 : index
    %299 = vector.load %arg9[%c3_143, %c0_144, %c0_145] : memref<4x2x128xf32, #tpu.memory_space<vmem>>, vector<1x2x8xf32>
    %300 = vector.shape_cast %299 : vector<1x2x8xf32> to vector<2x8xf32>
    %301 = vector.shape_cast %267 : vector<2x8xf32> to vector<1x2x8xf32>
    tpu.vector_store %arg9[%c3_143, %c0_144, %c0_145], %301 {strides = array<i32>} : memref<4x2x128xf32, #tpu.memory_space<vmem>>, vector<1x2x8xf32>,
    %c3_146 = arith.constant 3 : index
    %c0_147 = arith.constant 0 : index
    %c8_148 = arith.constant 8 : index
    %302 = vector.load %arg9[%c3_146, %c0_147, %c8_148] : memref<4x2x128xf32, #tpu.memory_space<vmem>>, vector<1x2x8xf32>
    %303 = vector.shape_cast %302 : vector<1x2x8xf32> to vector<2x8xf32>
    %304 = vector.shape_cast %284 : vector<2x8xf32> to vector<1x2x8xf32>
    tpu.vector_store %arg9[%c3_146, %c0_147, %c8_148], %304 {strides = array<i32>} : memref<4x2x128xf32, #tpu.memory_space<vmem>>, vector<1x2x8xf32>,
    %c3_149 = arith.constant 3 : index
    %c0_150 = arith.constant 0 : index
    %c16_151 = arith.constant 16 : index
    %305 = vector.load %arg9[%c3_149, %c0_150, %c16_151] : memref<4x2x128xf32, #tpu.memory_space<vmem>>, vector<1x2x1xf32>
    %306 = vector.shape_cast %305 : vector<1x2x1xf32> to vector<2x1xf32>
    %307 = vector.shape_cast %298 : vector<2x1xf32> to vector<1x2x1xf32>
    tpu.vector_store %arg9[%c3_149, %c0_150, %c16_151], %307 {strides = array<i32>} : memref<4x2x128xf32, #tpu.memory_space<vmem>>, vector<1x2x1xf32>,
    %308 = arith.sitofp %291 : vector<2x1xi32> to vector<2x1xf32>
    %c3_152 = arith.constant 3 : index
    %c0_153 = arith.constant 0 : index
    %c17_154 = arith.constant 17 : index
    %309 = vector.load %arg9[%c3_152, %c0_153, %c17_154] : memref<4x2x128xf32, #tpu.memory_space<vmem>>, vector<1x2x1xf32>
    %310 = vector.shape_cast %309 : vector<1x2x1xf32> to vector<2x1xf32>
    %311 = vector.shape_cast %308 : vector<2x1xf32> to vector<1x2x1xf32>
    tpu.vector_store %arg9[%c3_152, %c0_153, %c17_154], %311 {strides = array<i32>} : memref<4x2x128xf32, #tpu.memory_space<vmem>>, vector<1x2x1xf32>,
    %c0_155 = arith.constant 0 : index
    %c0_156 = arith.constant 0 : index
    %312 = vector.load %arg10[%c0_155, %c0_156] : memref<2x32xf32, #tpu.memory_space<vmem>>, vector<2x32xf32>
    tpu.vector_store %arg10[%c0_155, %c0_156], %254 {strides = array<i32>} : memref<2x32xf32, #tpu.memory_space<vmem>>, vector<2x32xf32>,
    %c0_157 = arith.constant 0 : index
    %c0_158 = arith.constant 0 : index
    %313 = vector.load %arg11[%c0_157, %c0_158] : memref<2x32xf32, #tpu.memory_space<vmem>>, vector<2x32xf32>
    tpu.vector_store %arg11[%c0_157, %c0_158], %252 {strides = array<i32>} : memref<2x32xf32, #tpu.memory_space<vmem>>, vector<2x32xf32>,
    return
  }
}

</mosaic_0001>

<llo_original>
// kernel: decoder_rollout.1
$region0: #{decoder_rollout.1}
  #allocation0 [shape = 'u32[]', space=smem, size = 0x4, offset = 0x4, fixed_abs, tag = 'smem constant byte address 0x4 - core index']
  #allocation1 [shape = 'u32[144,128]{1,0:T(1,128)}', space=vmem, size = 0x12000, scoped, tag = 'internal scratch']
  %s0 = inlined_call_operand.vmem [shape: f32[4,2,8,32], index: 0, kind: input, shape index: {}]
  %s1 = inlined_call_operand.vmem [shape: f32[4,2,128], index: 1, kind: input, shape index: {}]
  %s2 = inlined_call_operand.vmem [shape: f32[4,2,1], index: 2, kind: input, shape index: {}]
  %s3 = inlined_call_operand.vmem [shape: f32[4,2,8], index: 3, kind: input, shape index: {}]
  %s4 = inlined_call_operand.vmem [shape: f32[2,32], index: 4, kind: input, shape index: {}]
  %s5 = inlined_call_operand.vmem [shape: f32[2,32], index: 5, kind: input, shape index: {}]
  %s6 = inlined_call_operand.vmem [shape: f32[32,128], index: 6, kind: input, shape index: {}]
  %s7 = inlined_call_operand.vmem [shape: f32[32,32], index: 7, kind: input, shape index: {}]
  %s8 = inlined_call_operand.vmem [shape: f32[2,32], index: 8, kind: input, shape index: {}]
  %s9 = inlined_call_operand.vmem [shape: f32[4,2,128], index: 9, kind: output, shape index: {0}]
  %s10 = inlined_call_operand.hbm [shape: f32[2,32], index: 10, kind: output, shape index: {1}]
  %s11 = inlined_call_operand.hbm [shape: f32[2,32], index: 11, kind: output, shape index: {2}]
  %12 = xla_tuple %s9, %s10, %s11
  %s13 = sld [smem:[#allocation0]]
  $region62: #{decoder_rollout.1} parent=0
    _
  %s15 = ssub.s32 1, %s13
  %s16 = scalar_select 0, %s15, %s13
  $region1: #{decoder_rollout.1} parent=0
    #allocation2 [shape = 'u8[1024]{0}', space=vmem, size = 0x400, scoped, tag = 'output window, operand 1, single buffered']
    #allocation3 [shape = 's32[1]{0}', space=sflag, size = 0x4, scoped, tag = 'scoped memory for decoder_rollout.1']
    #allocation4 [shape = 'u8[1024]{0}', space=vmem, size = 0x400, scoped, tag = 'output window, operand 2, single buffered']
    #allocation5 [shape = 's32[1]{0}', space=sflag, size = 0x4, scoped, tag = 'scoped memory for decoder_rollout.1']
    %17 = vsyncpa [#allocation3], 0
    %18 = vsyncpa [#allocation5], 0
    // Predicated region
    $region2: #{decoder_rollout.1} parent=1 // pred_check
      _
    $region3: #{decoder_rollout.1} parent=1 // pred_check_branch
      %20 = sbr.rel (0) target = $region5
    $region4: #{decoder_rollout.1} parent=1 // pred_region
      _
    $region5: #{decoder_rollout.1} parent=1 // pred_fallthru
      _
    // Predicated region
    $region6: #{decoder_rollout.1} parent=1 // pred_check
      _
    $region7: #{decoder_rollout.1} parent=1 // pred_check_branch
      %22 = sbr.rel (0) target = $region9
    $region8: #{decoder_rollout.1} parent=1 // pred_region
      _
    $region9: #{decoder_rollout.1} parent=1 // pred_fallthru
      _
    // Predicated region
    $region10: #{decoder_rollout.1} parent=1 // pred_check
      _
    $region11: #{decoder_rollout.1} parent=1 // pred_check_branch
      %24 = sbr.rel (0) target = $region13
    $region12: #{decoder_rollout.1} parent=1 // pred_region
      _
    $region13: #{decoder_rollout.1} parent=1 // pred_fallthru
      _
    // Predicated region
    $region14: #{decoder_rollout.1} parent=1 // pred_check
      _
    $region15: #{decoder_rollout.1} parent=1 // pred_check_branch
      %26 = sbr.rel (0) target = $region17
    $region16: #{decoder_rollout.1} parent=1 // pred_region
      _
    $region17: #{decoder_rollout.1} parent=1 // pred_fallthru
      _
    // Predicated region
    $region18: #{decoder_rollout.1} parent=1 // pred_check
      _
    $region19: #{decoder_rollout.1} parent=1 // pred_check_branch
      %28 = sbr.rel (0) target = $region21
    $region20: #{decoder_rollout.1} parent=1 // pred_region
      _
    $region21: #{decoder_rollout.1} parent=1 // pred_fallthru
      _
    // Predicated region
    $region22: #{decoder_rollout.1} parent=1 // pred_check
      _
    $region23: #{decoder_rollout.1} parent=1 // pred_check_branch
      %30 = sbr.rel (0) target = $region25
    $region24: #{decoder_rollout.1} parent=1 // pred_region
      _
    $region25: #{decoder_rollout.1} parent=1 // pred_fallthru
      _
    // Predicated region
    $region26: #{decoder_rollout.1} parent=1 // pred_check
      _
    $region27: #{decoder_rollout.1} parent=1 // pred_check_branch
      %32 = sbr.rel (0) target = $region29
    $region28: #{decoder_rollout.1} parent=1 // pred_region
      _
    $region29: #{decoder_rollout.1} parent=1 // pred_fallthru
      _
    // Predicated region
    $region30: #{decoder_rollout.1} parent=1 // pred_check
      _
    $region31: #{decoder_rollout.1} parent=1 // pred_check_branch
      %34 = sbr.rel (0) target = $region33
    $region32: #{decoder_rollout.1} parent=1 // pred_region
      _
    $region33: #{decoder_rollout.1} parent=1 // pred_fallthru
      _
    // Predicated region
    $region34: #{decoder_rollout.1} parent=1 // pred_check
      _
    $region35: #{decoder_rollout.1} parent=1 // pred_check_branch
      %36 = sbr.rel (0) target = $region37
    $region36: #{decoder_rollout.1} parent=1 // pred_region
      _
    $region37: #{decoder_rollout.1} parent=1 // pred_fallthru
      _
    %v37 = vld [vmem:[%s6] sm:$0xff]
    %v38 = vld [vmem:[%s6 + $0x8] sm:$0xff]
    %v39 = vld [vmem:[%s6 + $0x10] sm:$0xff]
    %v40 = vld [vmem:[%s6 + $0x18] sm:$0xff]
    %v41 = vld [vmem:[%s7] sm:$0xff]
    %v42 = vld [vmem:[%s7 + $0x8] sm:$0xff]
    %v43 = vld [vmem:[%s7 + $0x10] sm:$0xff]
    %v44 = vld [vmem:[%s7 + $0x18] sm:$0xff]
    %v45 = vld [vmem:[%s8] sm:$0x1]
    %v46 = vld [vmem:[%s8 + $0x1] sm:$0x1]
    %47 = vst [vmem:[%s9] sm:$0x3] 0.0
    %48 = vst [vmem:[%s9 + $0x2] sm:$0x3] 0.0
    %49 = vst [vmem:[%s9 + $0x4] sm:$0x3] 0.0
    %50 = vst [vmem:[%s9 + $0x6] sm:$0x3] 0.0
    %v51 = vld [vmem:[%s4] sm:$0x3]
    %v52 = vld [vmem:[%s5] sm:$0x3]
    %v53 = vld [vmem:[%s1] sm:$0x3]
    %vm54 = vcmask 261120
    %v56 = vsel %vm54, %v51, 0
    %58 = vmatprep.subr.mxu0 0.0
    %59 = vmatpush1.msra.mxu0 %v37
    %60 = vmatprep.subr.mxu0 0.0
    %61 = vmatpush1.msra.mxu0 %v38
    %62 = vmatprep.subr.mxu0 0.0
    %63 = vmatpush1.msra.mxu0 %v39
    %64 = vmatprep.subr.mxu0 0.0
    %65 = vmatpush1.msra.mxu0 %v40
    %66 = vmatprep.subr.mxu0 0.0
    %67 = vmatpush1.msra.mxu0 0.0
    %68 = vmatprep.subr.mxu0 0.0
    %69 = vmatpush1.msra.mxu0 0.0
    %70 = vmatprep.subr.mxu0 0.0
    %71 = vmatpush1.msra.mxu0 0.0
    %72 = vmatprep.subr.mxu0 0.0
    %73 = vmatpush1.msra.mxu0 0.0
    %74 = vmatprep.subr.mxu0 0.0
    %75 = vmatpush1.msra.mxu0 0.0
    %76 = vmatprep.subr.mxu0 0.0
    %77 = vmatpush1.msra.mxu0 0.0
    %78 = vmatprep.subr.mxu0 0.0
    %79 = vmatpush1.msra.mxu0 0.0
    %80 = vmatprep.subr.mxu0 0.0
    %81 = vmatpush1.msra.mxu0 0.0
    %82 = vmatprep.subr.mxu0 0.0
    %83 = vmatpush1.msra.mxu0 0.0
    %84 = vmatprep.subr.mxu0 0.0
    %85 = vmatpush1.msra.mxu0 0.0
    %86 = vmatprep.subr.mxu0 0.0
    %87 = vmatpush1.msra.mxu0 0.0
    %88 = vmatprep.subr.mxu0 0.0
    %89 = vmatpush1.msra.mxu0 0.0
    %90 = vmatprep.subr.mxu0 0.0
    %91 = vmatpush1.msra.mxu0 0.0
    %92 = vmatprep.subr.mxu0 0.0
    %93 = vmatpush1.msra.mxu0 0.0
    %94 = vmatprep.subr.mxu0 0.0
    %95 = vmatpush1.msra.mxu0 0.0
    %96 = vmatprep.subr.mxu0 0.0
    %97 = vmatpush1.msra.mxu0 0.0
    %98 = vmatprep.subr.mxu0 0.0
    %99 = vmatpush1.msra.mxu0 0.0
    %100 = vmatprep.subr.mxu0 0.0
    %101 = vmatpush1.msra.mxu0 0.0
    %102 = vmatprep.subr.mxu0 0.0
    %103 = vmatpush1.msra.mxu0 0.0
    %104 = vmatprep.subr.mxu0 0.0
    %105 = vmatpush1.msra.mxu0 0.0
    %106 = vmatprep.subr.mxu0 0.0
    %107 = vmatpush1.msra.mxu0 0.0
    %108 = vmatprep.subr.mxu0 0.0
    %109 = vmatpush1.msra.mxu0 0.0
    %110 = vmatprep.subr.mxu0 0.0
    %111 = vmatpush1.msra.mxu0 0.0
    %112 = vmatprep.subr.mxu0 0.0
    %113 = vmatpush1.msra.mxu0 0.0
    %114 = vmatprep.subr.mxu0 0.0
    %115 = vmatpush1.msra.mxu0 0.0
    %116 = vmatprep.subr.mxu0 0.0
    %117 = vmatpush1.msra.mxu0 0.0
    %118 = vmatprep.subr.mxu0 0.0
    %119 = vmatpush1.msra.mxu0 0.0
    %120 = vmatprep.subr.mxu0 0.0
    %121 = vmatpush1.msra.mxu0 0.0
    %122 = vmatprep.mubr.f32.mxu0 0.0
    %123 = vmatmul.mubr.f32.gmra.mrb[0].mxu0 %v56
    %v124 = vpop.f32.mrb[0].mxu0
    %v125 = vadd.f32 0.0, %v124
    %v126 = vpop.f32.mrb[0].mxu0
    %127 = vdwg.mxu0
    %v128 = vadd.f32 %v53, %v125
    %v129 = vxor.u32 %v128, 2147483648
    %v130 = vmul.f32 %v129, 1.442695
    %v131 = vpow.pop %v130
    %v132 = vadd.f32 %v131, 1.0
    %v133 = vrcp.pop %v132
    %v134 = vmul.f32 1.0, %v133
    %v135 = vtanh.pop %v128
    %137 = vrot.lane.b32.xlu0 %v52, 32
    %v138 = vpop.permute.xlu0 %137
    %v140 = vmul.f32 %v134, %v138
    %142 = vrot.lane.b32.xlu0 %v135, 64
    %v143 = vpop.permute.xlu0 %142
    %v145 = vmul.f32 %v134, %v143
    %147 = vrot.lane.b32.xlu0 %v145, 32
    %v148 = vpop.permute.xlu0 %147
    %v150 = vadd.f32 %v140, %v148
    %v151 = vtanh.pop %v150
    %153 = vrot.lane.b32.xlu0 %v151, 64
    %v154 = vpop.permute.xlu0 %153
    %v156 = vmul.f32 %v134, %v154
    %v157 = vlaneseq
    %v158 = vshrl.u32 %v157, 7
    %v159 = vsub.s32 0, %v158
    %v160 = vrot.slane %v45, %v159
    %162 = vrot.lane.b32.xlu0 %v156, 32
    %v163 = vpop.permute.xlu0 %162
    %v164 = vsel %vm54, %v163, 0
    %166 = vmatprep.subr.mxu0 0.0
    %167 = vmatpush1.msra.mxu0 %v41
    %168 = vmatprep.subr.mxu0 0.0
    %169 = vmatpush1.msra.mxu0 %v42
    %170 = vmatprep.subr.mxu0 0.0
    %171 = vmatpush1.msra.mxu0 %v43
    %172 = vmatprep.subr.mxu0 0.0
    %173 = vmatpush1.msra.mxu0 %v44
    %174 = vmatprep.subr.mxu0 0.0
    %175 = vmatpush1.msra.mxu0 0.0
    %176 = vmatprep.subr.mxu0 0.0
    %177 = vmatpush1.msra.mxu0 0.0
    %178 = vmatprep.subr.mxu0 0.0
    %179 = vmatpush1.msra.mxu0 0.0
    %180 = vmatprep.subr.mxu0 0.0
    %181 = vmatpush1.msra.mxu0 0.0
    %182 = vmatprep.subr.mxu0 0.0
    %183 = vmatpush1.msra.mxu0 0.0
    %184 = vmatprep.subr.mxu0 0.0
    %185 = vmatpush1.msra.mxu0 0.0
    %186 = vmatprep.subr.mxu0 0.0
    %187 = vmatpush1.msra.mxu0 0.0
    %188 = vmatprep.subr.mxu0 0.0
    %189 = vmatpush1.msra.mxu0 0.0
    %190 = vmatprep.subr.mxu0 0.0
    %191 = vmatpush1.msra.mxu0 0.0
    %192 = vmatprep.subr.mxu0 0.0
    %193 = vmatpush1.msra.mxu0 0.0
    %194 = vmatprep.subr.mxu0 0.0
    %195 = vmatpush1.msra.mxu0 0.0
    %196 = vmatprep.subr.mxu0 0.0
    %197 = vmatpush1.msra.mxu0 0.0
    %198 = vmatprep.subr.mxu0 0.0
    %199 = vmatpush1.msra.mxu0 0.0
    %200 = vmatprep.subr.mxu0 0.0
    %201 = vmatpush1.msra.mxu0 0.0
    %202 = vmatprep.subr.mxu0 0.0
    %203 = vmatpush1.msra.mxu0 0.0
    %204 = vmatprep.subr.mxu0 0.0
    %205 = vmatpush1.msra.mxu0 0.0
    %206 = vmatprep.subr.mxu0 0.0
    %207 = vmatpush1.msra.mxu0 0.0
    %208 = vmatprep.subr.mxu0 0.0
    %209 = vmatpush1.msra.mxu0 0.0
    %210 = vmatprep.subr.mxu0 0.0
    %211 = vmatpush1.msra.mxu0 0.0
    %212 = vmatprep.subr.mxu0 0.0
    %213 = vmatpush1.msra.mxu0 0.0
    %214 = vmatprep.subr.mxu0 0.0
    %215 = vmatpush1.msra.mxu0 0.0
    %216 = vmatprep.subr.mxu0 0.0
    %217 = vmatpush1.msra.mxu0 0.0
    %218 = vmatprep.subr.mxu0 0.0
    %219 = vmatpush1.msra.mxu0 0.0
    %220 = vmatprep.subr.mxu0 0.0
    %221 = vmatpush1.msra.mxu0 0.0
    %222 = vmatprep.subr.mxu0 0.0
    %223 = vmatpush1.msra.mxu0 0.0
    %224 = vmatprep.subr.mxu0 0.0
    %225 = vmatpush1.msra.mxu0 0.0
    %226 = vmatprep.subr.mxu0 0.0
    %227 = vmatpush1.msra.mxu0 0.0
    %228 = vmatprep.subr.mxu0 0.0
    %229 = vmatpush1.msra.mxu0 0.0
    %230 = vmatprep.mubr.f32.mxu0 0.0
    %231 = vmatmul.mubr.f32.gmra.mrb[0].mxu0 %v164
    %v232 = vpop.f32.mrb[0].mxu0
    %v233 = vadd.f32 %v160, %v232
    %v234 = vpop.f32.mrb[0].mxu0
    %235 = vdwg.mxu0
    %v236 = vld [vmem:[%s0] sm:$0xff]
    %v237 = vld [vmem:[%s0 + $0x8] sm:$0xff]
    %v240 = vunpack.c.l.s4 1966171168
    %v241 = vunpack.c.0.s8 %v240
    %v242 = vlaneseq
    %v243 = vshrl.u32 %v242, 7
    %v244 = vsub.s32 %v241, %v243
    %v245 = vrot.slane %v233, %v244
    %v246 = vcombine.high %v245, %v245
    %v248 = vunpack.c.l.s4 1966171168
    %v249 = vunpack.c.0.s8 %v248
    %v250 = vlaneseq
    %v251 = vshrl.u32 %v250, 7
    %v252 = vsub.s32 %v249, %v251
    %v253 = vrot.slane %v245, %v252
    %v255 = vunpack.c.l.s4 1966171168
    %v256 = vunpack.c.0.s8 %v255
    %v257 = vlaneseq
    %v258 = vshrl.u32 %v257, 7
    %v259 = vsub.s32 %v256, %v258
    %v260 = vrot.slane %v246, %v259
    %v261 = vlaneseq
    %v262 = vshrl.u32 %v261, 7
    %v263 = vsub.s32 0, %v262
    %v264 = vrot.slane %v253, %v263
    %v265 = vlaneseq
    %v266 = vshrl.u32 %v265, 7
    %v267 = vsub.s32 0, %v266
    %v268 = vrot.slane %v260, %v267
    %v271 = vadd.f32 %v236, %v264
    %v272 = vadd.f32 %v237, %v268
    %v273 = vtanh.pop %v271
    %v274 = vtanh.pop %v272
    %v275 = vlaneseq
    %v276 = vshrl.u32 %v275, 7
    %v277 = vsub.s32 0, %v276
    %v278 = vrot.slane %v46, %v277
    %v279 = vmul.f32 %v273, %v278
    %v280 = vmul.f32 %v274, %v278
    %v281 = vsel %vm54, %v279, 0.0
    %282 = vadd.xlane.f32.xlu0 %v281
    %v283 = vpop.xlane.xlu0 %282
    %v284 = vsel %vm54, %v280, 0.0
    %285 = vadd.xlane.f32.xlu0 %v284
    %v286 = vpop.xlane.xlu0 %285
    %v287 = vld [vmem:[%s3] sm:$0x3]
    %vm288 = vcmp.ne.f32.partialorder %v287, 0.0
    %v291 = vlaneseq
    %v292 = vand.u32 %v291, 127
    %v293 = vlaneseq
    %v294 = vshrl.u32 %v293, 7
    %v295 = vsub.s32 %v292, %v294
    %v296 = vrot.slane %v283, %v295
    %v297 = vlaneseq
    %v298 = vshrl.u32 %v297, 7
    %v299 = vsub.s32 %v292, %v298
    %v300 = vrot.slane %v286, %v299
    %vm301 = vcmask 1041409
    %v302 = vsel %vm301, %v300, %v296
    %v304 = vsel %vm288, %v302, -100000.0
    %vm305 = vcmask 58368
    %v306 = vsel %vm305, %v304, -inf
    %307 = vmax.xlane.f32.xlu0 %v306
    %v308 = vpop.xlane.xlu0 %307
    %v309 = vsub.f32 %v304, %v308
    %v310 = vmul.f32 %v309, 1.442695
    %v311 = vpow.pop %v310
    %v312 = vsel %vm305, %v311, 0.0
    %313 = vadd.xlane.f32.xlu0 %v312
    %v314 = vpop.xlane.xlu0 %313
    %v315 = vlog2.pop %v314
    %v316 = vmul.f32 %v315, 0.6931472
    %v317 = vsub.f32 %v309, %v316
    %v318 = vmul.f32 %v317, 1.442695
    %v319 = vpow.pop %v318
    %vm320 = vcmp.eq.f32.partialorder %v304, %v308
    %v321 = vsel %vm320, %v292, 8
    %v322 = vsel %vm305, %v321, 2147483647
    %v323 = vand.u32 %v322, 65535
    %v324 = vshra.s32 %v322, 16
    %v325 = vcvt.s32.f32 %v323
    %v326 = vcvt.s32.f32 %v324
    %327 = vmin.xlane.f32.xlu0 %v326
    %v328 = vpop.xlane.xlu0 %327
    %vm329 = vcmp.eq.f32.partialorder %v326, %v328
    %v330 = vsel %vm329, %v325, inf
    %331 = vmin.xlane.f32.xlu0 %v330
    %v332 = vpop.xlane.xlu0 %331
    %v333 = vcvt.f32.s32 %v332
    %v334 = vcvt.f32.s32 %v328
    %v335 = vshll.u32 %v334, 16
    %v336 = vadd.s32 %v335, %v333
    %v337 = vsel %vm305, %v317, -inf
    %338 = vmax.xlane.f32.xlu0 %v337
    %v339 = vpop.xlane.xlu0 %338
    %v340 = vld [vmem:[%s2] sm:$0x3]
    %v341 = vsub.f32 1.0, %v340
    %v342 = vmul.f32 %v339, %v341
    %343 = vst.msk [vmem:[%s9] sm:$0x3] %vm305, %v302
    %345 = vrot.lane.b32.xlu0 %v319, 8
    %v346 = vpop.permute.xlu0 %345
    %vm348 = vcmask 123968
    %349 = vst.msk [vmem:[%s9] sm:$0x3] %vm348, %v346
    %351 = vrot.lane.b32.xlu0 %v342, 16
    %v352 = vpop.permute.xlu0 %351
    %vm354 = vcmask 132224
    %355 = vst.msk [vmem:[%s9] sm:$0x3] %vm354, %v352
    %v356 = vcvt.s32.f32 %v336
    %vm357 = vcmask 140424
    %358 = vst.msk [vmem:[%s9] sm:$0x3] %vm357, %v356
    %s359 = scalar_lea.vmem %s1, 2
    %v360 = vld [vmem:[%s359] sm:$0x3]
    %361 = vmatprep.subr.mxu0 0.0
    %362 = vmatpush1.msra.mxu0 %v37
    %363 = vmatprep.subr.mxu0 0.0
    %364 = vmatpush1.msra.mxu0 %v38
    %365 = vmatprep.subr.mxu0 0.0
    %366 = vmatpush1.msra.mxu0 %v39
    %367 = vmatprep.subr.mxu0 0.0
    %368 = vmatpush1.msra.mxu0 %v40
    %369 = vmatprep.subr.mxu0 0.0
    %370 = vmatpush1.msra.mxu0 0.0
    %371 = vmatprep.subr.mxu0 0.0
    %372 = vmatpush1.msra.mxu0 0.0
    %373 = vmatprep.subr.mxu0 0.0
    %374 = vmatpush1.msra.mxu0 0.0
    %375 = vmatprep.subr.mxu0 0.0
    %376 = vmatpush1.msra.mxu0 0.0
    %377 = vmatprep.subr.mxu0 0.0
    %378 = vmatpush1.msra.mxu0 0.0
    %379 = vmatprep.subr.mxu0 0.0
    %380 = vmatpush1.msra.mxu0 0.0
    %381 = vmatprep.subr.mxu0 0.0
    %382 = vmatpush1.msra.mxu0 0.0
    %383 = vmatprep.subr.mxu0 0.0
    %384 = vmatpush1.msra.mxu0 0.0
    %385 = vmatprep.subr.mxu0 0.0
    %386 = vmatpush1.msra.mxu0 0.0
    %387 = vmatprep.subr.mxu0 0.0
    %388 = vmatpush1.msra.mxu0 0.0
    %389 = vmatprep.subr.mxu0 0.0
    %390 = vmatpush1.msra.mxu0 0.0
    %391 = vmatprep.subr.mxu0 0.0
    %392 = vmatpush1.msra.mxu0 0.0
    %393 = vmatprep.subr.mxu0 0.0
    %394 = vmatpush1.msra.mxu0 0.0
    %395 = vmatprep.subr.mxu0 0.0
    %396 = vmatpush1.msra.mxu0 0.0
    %397 = vmatprep.subr.mxu0 0.0
    %398 = vmatpush1.msra.mxu0 0.0
    %399 = vmatprep.subr.mxu0 0.0
    %400 = vmatpush1.msra.mxu0 0.0
    %401 = vmatprep.subr.mxu0 0.0
    %402 = vmatpush1.msra.mxu0 0.0
    %403 = vmatprep.subr.mxu0 0.0
    %404 = vmatpush1.msra.mxu0 0.0
    %405 = vmatprep.subr.mxu0 0.0
    %406 = vmatpush1.msra.mxu0 0.0
    %407 = vmatprep.subr.mxu0 0.0
    %408 = vmatpush1.msra.mxu0 0.0
    %409 = vmatprep.subr.mxu0 0.0
    %410 = vmatpush1.msra.mxu0 0.0
    %411 = vmatprep.subr.mxu0 0.0
    %412 = vmatpush1.msra.mxu0 0.0
    %413 = vmatprep.subr.mxu0 0.0
    %414 = vmatpush1.msra.mxu0 0.0
    %415 = vmatprep.subr.mxu0 0.0
    %416 = vmatpush1.msra.mxu0 0.0
    %417 = vmatprep.subr.mxu0 0.0
    %418 = vmatpush1.msra.mxu0 0.0
    %419 = vmatprep.subr.mxu0 0.0
    %420 = vmatpush1.msra.mxu0 0.0
    %421 = vmatprep.subr.mxu0 0.0
    %422 = vmatpush1.msra.mxu0 0.0
    %423 = vmatprep.subr.mxu0 0.0
    %424 = vmatpush1.msra.mxu0 0.0
    %425 = vmatprep.mubr.f32.mxu0 0.0
    %426 = vmatmul.mubr.f32.gmra.mrb[0].mxu0 %v164
    %v427 = vpop.f32.mrb[0].mxu0
    %v428 = vadd.f32 0.0, %v427
    %v429 = vpop.f32.mrb[0].mxu0
    %430 = vdwg.mxu0
    %v431 = vadd.f32 %v360, %v428
    %v432 = vxor.u32 %v431, 2147483648
    %v433 = vmul.f32 %v432, 1.442695
    %v434 = vpow.pop %v433
    %v435 = vadd.f32 %v434, 1.0
    %v436 = vrcp.pop %v435
    %v437 = vmul.f32 1.0, %v436
    %v438 = vtanh.pop %v431
    %v439 = vmul.f32 %v437, %v150
    %441 = vrot.lane.b32.xlu0 %v438, 64
    %v442 = vpop.permute.xlu0 %441
    %v444 = vmul.f32 %v437, %v442
    %446 = vrot.lane.b32.xlu0 %v444, 32
    %v447 = vpop.permute.xlu0 %446
    %v449 = vadd.f32 %v439, %v447
    %v450 = vtanh.pop %v449
    %452 = vrot.lane.b32.xlu0 %v450, 64
    %v453 = vpop.permute.xlu0 %452
    %v455 = vmul.f32 %v437, %v453
    %457 = vrot.lane.b32.xlu0 %v455, 32
    %v458 = vpop.permute.xlu0 %457
    %v459 = vsel %vm54, %v458, 0
    %461 = vmatprep.subr.mxu0 0.0
    %462 = vmatpush1.msra.mxu0 %v41
    %463 = vmatprep.subr.mxu0 0.0
    %464 = vmatpush1.msra.mxu0 %v42
    %465 = vmatprep.subr.mxu0 0.0
    %466 = vmatpush1.msra.mxu0 %v43
    %467 = vmatprep.subr.mxu0 0.0
    %468 = vmatpush1.msra.mxu0 %v44
    %469 = vmatprep.subr.mxu0 0.0
    %470 = vmatpush1.msra.mxu0 0.0
    %471 = vmatprep.subr.mxu0 0.0
    %472 = vmatpush1.msra.mxu0 0.0
    %473 = vmatprep.subr.mxu0 0.0
    %474 = vmatpush1.msra.mxu0 0.0
    %475 = vmatprep.subr.mxu0 0.0
    %476 = vmatpush1.msra.mxu0 0.0
    %477 = vmatprep.subr.mxu0 0.0
    %478 = vmatpush1.msra.mxu0 0.0
    %479 = vmatprep.subr.mxu0 0.0
    %480 = vmatpush1.msra.mxu0 0.0
    %481 = vmatprep.subr.mxu0 0.0
    %482 = vmatpush1.msra.mxu0 0.0
    %483 = vmatprep.subr.mxu0 0.0
    %484 = vmatpush1.msra.mxu0 0.0
    %485 = vmatprep.subr.mxu0 0.0
    %486 = vmatpush1.msra.mxu0 0.0
    %487 = vmatprep.subr.mxu0 0.0
    %488 = vmatpush1.msra.mxu0 0.0
    %489 = vmatprep.subr.mxu0 0.0
    %490 = vmatpush1.msra.mxu0 0.0
    %491 = vmatprep.subr.mxu0 0.0
    %492 = vmatpush1.msra.mxu0 0.0
    %493 = vmatprep.subr.mxu0 0.0
    %494 = vmatpush1.msra.mxu0 0.0
    %495 = vmatprep.subr.mxu0 0.0
    %496 = vmatpush1.msra.mxu0 0.0
    %497 = vmatprep.subr.mxu0 0.0
    %498 = vmatpush1.msra.mxu0 0.0
    %499 = vmatprep.subr.mxu0 0.0
    %500 = vmatpush1.msra.mxu0 0.0
    %501 = vmatprep.subr.mxu0 0.0
    %502 = vmatpush1.msra.mxu0 0.0
    %503 = vmatprep.subr.mxu0 0.0
    %504 = vmatpush1.msra.mxu0 0.0
    %505 = vmatprep.subr.mxu0 0.0
    %506 = vmatpush1.msra.mxu0 0.0
    %507 = vmatprep.subr.mxu0 0.0
    %508 = vmatpush1.msra.mxu0 0.0
    %509 = vmatprep.subr.mxu0 0.0
    %510 = vmatpush1.msra.mxu0 0.0
    %511 = vmatprep.subr.mxu0 0.0
    %512 = vmatpush1.msra.mxu0 0.0
    %513 = vmatprep.subr.mxu0 0.0
    %514 = vmatpush1.msra.mxu0 0.0
    %515 = vmatprep.subr.mxu0 0.0
    %516 = vmatpush1.msra.mxu0 0.0
    %517 = vmatprep.subr.mxu0 0.0
    %518 = vmatpush1.msra.mxu0 0.0
    %519 = vmatprep.subr.mxu0 0.0
    %520 = vmatpush1.msra.mxu0 0.0
    %521 = vmatprep.subr.mxu0 0.0
    %522 = vmatpush1.msra.mxu0 0.0
    %523 = vmatprep.subr.mxu0 0.0
    %524 = vmatpush1.msra.mxu0 0.0
    %525 = vmatprep.mubr.f32.mxu0 0.0
    %526 = vmatmul.mubr.f32.gmra.mrb[0].mxu0 %v459
    %v527 = vpop.f32.mrb[0].mxu0
    %v528 = vadd.f32 %v160, %v527
    %v529 = vpop.f32.mrb[0].mxu0
    %530 = vdwg.mxu0
    %s531 = scalar_lea.vmem %s0, 16
    %v532 = vld [vmem:[%s531] sm:$0xff]
    %v533 = vld [vmem:[%s531 + $0x8] sm:$0xff]
    %v536 = vunpack.c.l.s4 1966171168
    %v537 = vunpack.c.0.s8 %v536
    %v538 = vlaneseq
    %v539 = vshrl.u32 %v538, 7
    %v540 = vsub.s32 %v537, %v539
    %v541 = vrot.slane %v528, %v540
    %v542 = vcombine.high %v541, %v541
    %v544 = vunpack.c.l.s4 1966171168
    %v545 = vunpack.c.0.s8 %v544
    %v546 = vlaneseq
    %v547 = vshrl.u32 %v546, 7
    %v548 = vsub.s32 %v545, %v547
    %v549 = vrot.slane %v541, %v548
    %v551 = vunpack.c.l.s4 1966171168
    %v552 = vunpack.c.0.s8 %v551
    %v553 = vlaneseq
    %v554 = vshrl.u32 %v553, 7
    %v555 = vsub.s32 %v552, %v554
    %v556 = vrot.slane %v542, %v555
    %v557 = vlaneseq
    %v558 = vshrl.u32 %v557, 7
    %v559 = vsub.s32 0, %v558
    %v560 = vrot.slane %v549, %v559
    %v561 = vlaneseq
    %v562 = vshrl.u32 %v561, 7
    %v563 = vsub.s32 0, %v562
    %v564 = vrot.slane %v556, %v563
    %v567 = vadd.f32 %v532, %v560
    %v568 = vadd.f32 %v533, %v564
    %v569 = vtanh.pop %v567
    %v570 = vtanh.pop %v568
    %v571 = vmul.f32 %v569, %v278
    %v572 = vmul.f32 %v570, %v278
    %v573 = vsel %vm54, %v571, 0.0
    %574 = vadd.xlane.f32.xlu0 %v573
    %v575 = vpop.xlane.xlu0 %574
    %v576 = vsel %vm54, %v572, 0.0
    %577 = vadd.xlane.f32.xlu0 %v576
    %v578 = vpop.xlane.xlu0 %577
    %s579 = scalar_lea.vmem %s3, 2
    %v580 = vld [vmem:[%s579] sm:$0x3]
    %vm581 = vcmp.ne.f32.partialorder %v580, 0.0
    %v584 = vlaneseq
    %v585 = vshrl.u32 %v584, 7
    %v586 = vsub.s32 %v292, %v585
    %v587 = vrot.slane %v575, %v586
    %v588 = vlaneseq
    %v589 = vshrl.u32 %v588, 7
    %v590 = vsub.s32 %v292, %v589
    %v591 = vrot.slane %v578, %v590
    %v592 = vsel %vm301, %v591, %v587
    %v594 = vsel %vm581, %v592, -100000.0
    %v595 = vsel %vm305, %v594, -inf
    %596 = vmax.xlane.f32.xlu0 %v595
    %v597 = vpop.xlane.xlu0 %596
    %v598 = vsub.f32 %v594, %v597
    %v599 = vmul.f32 %v598, 1.442695
    %v600 = vpow.pop %v599
    %v601 = vsel %vm305, %v600, 0.0
    %602 = vadd.xlane.f32.xlu0 %v601
    %v603 = vpop.xlane.xlu0 %602
    %v604 = vlog2.pop %v603
    %v605 = vmul.f32 %v604, 0.6931472
    %v606 = vsub.f32 %v598, %v605
    %v607 = vmul.f32 %v606, 1.442695
    %v608 = vpow.pop %v607
    %vm609 = vcmp.eq.f32.partialorder %v594, %v597
    %v610 = vsel %vm609, %v292, 8
    %v611 = vsel %vm305, %v610, 2147483647
    %v612 = vand.u32 %v611, 65535
    %v613 = vshra.s32 %v611, 16
    %v614 = vcvt.s32.f32 %v612
    %v615 = vcvt.s32.f32 %v613
    %616 = vmin.xlane.f32.xlu0 %v615
    %v617 = vpop.xlane.xlu0 %616
    %vm618 = vcmp.eq.f32.partialorder %v615, %v617
    %v619 = vsel %vm618, %v614, inf
    %620 = vmin.xlane.f32.xlu0 %v619
    %v621 = vpop.xlane.xlu0 %620
    %v622 = vcvt.f32.s32 %v621
    %v623 = vcvt.f32.s32 %v617
    %v624 = vshll.u32 %v623, 16
    %v625 = vadd.s32 %v624, %v622
    %v626 = vsel %vm305, %v606, -inf
    %627 = vmax.xlane.f32.xlu0 %v626
    %v628 = vpop.xlane.xlu0 %627
    %s629 = scalar_lea.vmem %s2, 2
    %v630 = vld [vmem:[%s629] sm:$0x3]
    %v631 = vsub.f32 1.0, %v630
    %v632 = vmul.f32 %v628, %v631
    %s633 = scalar_lea.vmem %s9, 2
    %634 = vst.msk [vmem:[%s633] sm:$0x3] %vm305, %v592
    %636 = vrot.lane.b32.xlu0 %v608, 8
    %v637 = vpop.permute.xlu0 %636
    %639 = vst.msk [vmem:[%s633] sm:$0x3] %vm348, %v637
    %641 = vrot.lane.b32.xlu0 %v632, 16
    %v642 = vpop.permute.xlu0 %641
    %644 = vst.msk [vmem:[%s633] sm:$0x3] %vm354, %v642
    %v645 = vcvt.s32.f32 %v625
    %646 = vst.msk [vmem:[%s633] sm:$0x3] %vm357, %v645
    %s647 = scalar_lea.vmem %s1, 4
    %v648 = vld [vmem:[%s647] sm:$0x3]
    %649 = vmatprep.subr.mxu0 0.0
    %650 = vmatpush1.msra.mxu0 %v37
    %651 = vmatprep.subr.mxu0 0.0
    %652 = vmatpush1.msra.mxu0 %v38
    %653 = vmatprep.subr.mxu0 0.0
    %654 = vmatpush1.msra.mxu0 %v39
    %655 = vmatprep.subr.mxu0 0.0
    %656 = vmatpush1.msra.mxu0 %v40
    %657 = vmatprep.subr.mxu0 0.0
    %658 = vmatpush1.msra.mxu0 0.0
    %659 = vmatprep.subr.mxu0 0.0
    %660 = vmatpush1.msra.mxu0 0.0
    %661 = vmatprep.subr.mxu0 0.0
    %662 = vmatpush1.msra.mxu0 0.0
    %663 = vmatprep.subr.mxu0 0.0
    %664 = vmatpush1.msra.mxu0 0.0
    %665 = vmatprep.subr.mxu0 0.0
    %666 = vmatpush1.msra.mxu0 0.0
    %667 = vmatprep.subr.mxu0 0.0
    %668 = vmatpush1.msra.mxu0 0.0
    %669 = vmatprep.subr.mxu0 0.0
    %670 = vmatpush1.msra.mxu0 0.0
    %671 = vmatprep.subr.mxu0 0.0
    %672 = vmatpush1.msra.mxu0 0.0
    %673 = vmatprep.subr.mxu0 0.0
    %674 = vmatpush1.msra.mxu0 0.0
    %675 = vmatprep.subr.mxu0 0.0
    %676 = vmatpush1.msra.mxu0 0.0
    %677 = vmatprep.subr.mxu0 0.0
    %678 = vmatpush1.msra.mxu0 0.0
    %679 = vmatprep.subr.mxu0 0.0
    %680 = vmatpush1.msra.mxu0 0.0
    %681 = vmatprep.subr.mxu0 0.0
    %682 = vmatpush1.msra.mxu0 0.0
    %683 = vmatprep.subr.mxu0 0.0
    %684 = vmatpush1.msra.mxu0 0.0
    %685 = vmatprep.subr.mxu0 0.0
    %686 = vmatpush1.msra.mxu0 0.0
    %687 = vmatprep.subr.mxu0 0.0
    %688 = vmatpush1.msra.mxu0 0.0
    %689 = vmatprep.subr.mxu0 0.0
    %690 = vmatpush1.msra.mxu0 0.0
    %691 = vmatprep.subr.mxu0 0.0
    %692 = vmatpush1.msra.mxu0 0.0
    %693 = vmatprep.subr.mxu0 0.0
    %694 = vmatpush1.msra.mxu0 0.0
    %695 = vmatprep.subr.mxu0 0.0
    %696 = vmatpush1.msra.mxu0 0.0
    %697 = vmatprep.subr.mxu0 0.0
    %698 = vmatpush1.msra.mxu0 0.0
    %699 = vmatprep.subr.mxu0 0.0
    %700 = vmatpush1.msra.mxu0 0.0
    %701 = vmatprep.subr.mxu0 0.0
    %702 = vmatpush1.msra.mxu0 0.0
    %703 = vmatprep.subr.mxu0 0.0
    %704 = vmatpush1.msra.mxu0 0.0
    %705 = vmatprep.subr.mxu0 0.0
    %706 = vmatpush1.msra.mxu0 0.0
    %707 = vmatprep.subr.mxu0 0.0
    %708 = vmatpush1.msra.mxu0 0.0
    %709 = vmatprep.subr.mxu0 0.0
    %710 = vmatpush1.msra.mxu0 0.0
    %711 = vmatprep.subr.mxu0 0.0
    %712 = vmatpush1.msra.mxu0 0.0
    %713 = vmatprep.mubr.f32.mxu0 0.0
    %714 = vmatmul.mubr.f32.gmra.mrb[0].mxu0 %v459
    %v715 = vpop.f32.mrb[0].mxu0
    %v716 = vadd.f32 0.0, %v715
    %v717 = vpop.f32.mrb[0].mxu0
    %718 = vdwg.mxu0
    %v719 = vadd.f32 %v648, %v716
    %v720 = vxor.u32 %v719, 2147483648
    %v721 = vmul.f32 %v720, 1.442695
    %v722 = vpow.pop %v721
    %v723 = vadd.f32 %v722, 1.0
    %v724 = vrcp.pop %v723
    %v725 = vmul.f32 1.0, %v724
    %v726 = vtanh.pop %v719
    %v727 = vmul.f32 %v725, %v449
    %729 = vrot.lane.b32.xlu0 %v726, 64
    %v730 = vpop.permute.xlu0 %729
    %v732 = vmul.f32 %v725, %v730
    %734 = vrot.lane.b32.xlu0 %v732, 32
    %v735 = vpop.permute.xlu0 %734
    %v737 = vadd.f32 %v727, %v735
    %v738 = vtanh.pop %v737
    %740 = vrot.lane.b32.xlu0 %v738, 64
    %v741 = vpop.permute.xlu0 %740
    %v743 = vmul.f32 %v725, %v741
    %745 = vrot.lane.b32.xlu0 %v743, 32
    %v746 = vpop.permute.xlu0 %745
    %v747 = vsel %vm54, %v746, 0
    %749 = vmatprep.subr.mxu0 0.0
    %750 = vmatpush1.msra.mxu0 %v41
    %751 = vmatprep.subr.mxu0 0.0
    %752 = vmatpush1.msra.mxu0 %v42
    %753 = vmatprep.subr.mxu0 0.0
    %754 = vmatpush1.msra.mxu0 %v43
    %755 = vmatprep.subr.mxu0 0.0
    %756 = vmatpush1.msra.mxu0 %v44
    %757 = vmatprep.subr.mxu0 0.0
    %758 = vmatpush1.msra.mxu0 0.0
    %759 = vmatprep.subr.mxu0 0.0
    %760 = vmatpush1.msra.mxu0 0.0
    %761 = vmatprep.subr.mxu0 0.0
    %762 = vmatpush1.msra.mxu0 0.0
    %763 = vmatprep.subr.mxu0 0.0
    %764 = vmatpush1.msra.mxu0 0.0
    %765 = vmatprep.subr.mxu0 0.0
    %766 = vmatpush1.msra.mxu0 0.0
    %767 = vmatprep.subr.mxu0 0.0
    %768 = vmatpush1.msra.mxu0 0.0
    %769 = vmatprep.subr.mxu0 0.0
    %770 = vmatpush1.msra.mxu0 0.0
    %771 = vmatprep.subr.mxu0 0.0
    %772 = vmatpush1.msra.mxu0 0.0
    %773 = vmatprep.subr.mxu0 0.0
    %774 = vmatpush1.msra.mxu0 0.0
    %775 = vmatprep.subr.mxu0 0.0
    %776 = vmatpush1.msra.mxu0 0.0
    %777 = vmatprep.subr.mxu0 0.0
    %778 = vmatpush1.msra.mxu0 0.0
    %779 = vmatprep.subr.mxu0 0.0
    %780 = vmatpush1.msra.mxu0 0.0
    %781 = vmatprep.subr.mxu0 0.0
    %782 = vmatpush1.msra.mxu0 0.0
    %783 = vmatprep.subr.mxu0 0.0
    %784 = vmatpush1.msra.mxu0 0.0
    %785 = vmatprep.subr.mxu0 0.0
    %786 = vmatpush1.msra.mxu0 0.0
    %787 = vmatprep.subr.mxu0 0.0
    %788 = vmatpush1.msra.mxu0 0.0
    %789 = vmatprep.subr.mxu0 0.0
    %790 = vmatpush1.msra.mxu0 0.0
    %791 = vmatprep.subr.mxu0 0.0
    %792 = vmatpush1.msra.mxu0 0.0
    %793 = vmatprep.subr.mxu0 0.0
    %794 = vmatpush1.msra.mxu0 0.0
    %795 = vmatprep.subr.mxu0 0.0
    %796 = vmatpush1.msra.mxu0 0.0
    %797 = vmatprep.subr.mxu0 0.0
    %798 = vmatpush1.msra.mxu0 0.0
    %799 = vmatprep.subr.mxu0 0.0
    %800 = vmatpush1.msra.mxu0 0.0
    %801 = vmatprep.subr.mxu0 0.0
    %802 = vmatpush1.msra.mxu0 0.0
    %803 = vmatprep.subr.mxu0 0.0
    %804 = vmatpush1.msra.mxu0 0.0
    %805 = vmatprep.subr.mxu0 0.0
    %806 = vmatpush1.msra.mxu0 0.0
    %807 = vmatprep.subr.mxu0 0.0
    %808 = vmatpush1.msra.mxu0 0.0
    %809 = vmatprep.subr.mxu0 0.0
    %810 = vmatpush1.msra.mxu0 0.0
    %811 = vmatprep.subr.mxu0 0.0
    %812 = vmatpush1.msra.mxu0 0.0
    %813 = vmatprep.mubr.f32.mxu0 0.0
    %814 = vmatmul.mubr.f32.gmra.mrb[0].mxu0 %v747
    %v815 = vpop.f32.mrb[0].mxu0
    %v816 = vadd.f32 %v160, %v815
    %v817 = vpop.f32.mrb[0].mxu0
    %818 = vdwg.mxu0
    %s819 = scalar_lea.vmem %s0, 32
    %v820 = vld [vmem:[%s819] sm:$0xff]
    %v821 = vld [vmem:[%s819 + $0x8] sm:$0xff]
    %v824 = vunpack.c.l.s4 1966171168
    %v825 = vunpack.c.0.s8 %v824
    %v826 = vlaneseq
    %v827 = vshrl.u32 %v826, 7
    %v828 = vsub.s32 %v825, %v827
    %v829 = vrot.slane %v816, %v828
    %v830 = vcombine.high %v829, %v829
    %v832 = vunpack.c.l.s4 1966171168
    %v833 = vunpack.c.0.s8 %v832
    %v834 = vlaneseq
    %v835 = vshrl.u32 %v834, 7
    %v836 = vsub.s32 %v833, %v835
    %v837 = vrot.slane %v829, %v836
    %v839 = vunpack.c.l.s4 1966171168
    %v840 = vunpack.c.0.s8 %v839
    %v841 = vlaneseq
    %v842 = vshrl.u32 %v841, 7
    %v843 = vsub.s32 %v840, %v842
    %v844 = vrot.slane %v830, %v843
    %v845 = vlaneseq
    %v846 = vshrl.u32 %v845, 7
    %v847 = vsub.s32 0, %v846
    %v848 = vrot.slane %v837, %v847
    %v849 = vlaneseq
    %v850 = vshrl.u32 %v849, 7
    %v851 = vsub.s32 0, %v850
    %v852 = vrot.slane %v844, %v851
    %v855 = vadd.f32 %v820, %v848
    %v856 = vadd.f32 %v821, %v852
    %v857 = vtanh.pop %v855
    %v858 = vtanh.pop %v856
    %v859 = vmul.f32 %v857, %v278
    %v860 = vmul.f32 %v858, %v278
    %v861 = vsel %vm54, %v859, 0.0
    %862 = vadd.xlane.f32.xlu0 %v861
    %v863 = vpop.xlane.xlu0 %862
    %v864 = vsel %vm54, %v860, 0.0
    %865 = vadd.xlane.f32.xlu0 %v864
    %v866 = vpop.xlane.xlu0 %865
    %s867 = scalar_lea.vmem %s3, 4
    %v868 = vld [vmem:[%s867] sm:$0x3]
    %vm869 = vcmp.ne.f32.partialorder %v868, 0.0
    %v872 = vlaneseq
    %v873 = vshrl.u32 %v872, 7
    %v874 = vsub.s32 %v292, %v873
    %v875 = vrot.slane %v863, %v874
    %v876 = vlaneseq
    %v877 = vshrl.u32 %v876, 7
    %v878 = vsub.s32 %v292, %v877
    %v879 = vrot.slane %v866, %v878
    %v880 = vsel %vm301, %v879, %v875
    %v882 = vsel %vm869, %v880, -100000.0
    %v883 = vsel %vm305, %v882, -inf
    %884 = vmax.xlane.f32.xlu0 %v883
    %v885 = vpop.xlane.xlu0 %884
    %v886 = vsub.f32 %v882, %v885
    %v887 = vmul.f32 %v886, 1.442695
    %v888 = vpow.pop %v887
    %v889 = vsel %vm305, %v888, 0.0
    %890 = vadd.xlane.f32.xlu0 %v889
    %v891 = vpop.xlane.xlu0 %890
    %v892 = vlog2.pop %v891
    %v893 = vmul.f32 %v892, 0.6931472
    %v894 = vsub.f32 %v886, %v893
    %v895 = vmul.f32 %v894, 1.442695
    %v896 = vpow.pop %v895
    %vm897 = vcmp.eq.f32.partialorder %v882, %v885
    %v898 = vsel %vm897, %v292, 8
    %v899 = vsel %vm305, %v898, 2147483647
    %v900 = vand.u32 %v899, 65535
    %v901 = vshra.s32 %v899, 16
    %v902 = vcvt.s32.f32 %v900
    %v903 = vcvt.s32.f32 %v901
    %904 = vmin.xlane.f32.xlu0 %v903
    %v905 = vpop.xlane.xlu0 %904
    %vm906 = vcmp.eq.f32.partialorder %v903, %v905
    %v907 = vsel %vm906, %v902, inf
    %908 = vmin.xlane.f32.xlu0 %v907
    %v909 = vpop.xlane.xlu0 %908
    %v910 = vcvt.f32.s32 %v909
    %v911 = vcvt.f32.s32 %v905
    %v912 = vshll.u32 %v911, 16
    %v913 = vadd.s32 %v912, %v910
    %v914 = vsel %vm305, %v894, -inf
    %915 = vmax.xlane.f32.xlu0 %v914
    %v916 = vpop.xlane.xlu0 %915
    %s917 = scalar_lea.vmem %s2, 4
    %v918 = vld [vmem:[%s917] sm:$0x3]
    %v919 = vsub.f32 1.0, %v918
    %v920 = vmul.f32 %v916, %v919
    %s921 = scalar_lea.vmem %s9, 4
    %922 = vst.msk [vmem:[%s921] sm:$0x3] %vm305, %v880
    %924 = vrot.lane.b32.xlu0 %v896, 8
    %v925 = vpop.permute.xlu0 %924
    %927 = vst.msk [vmem:[%s921] sm:$0x3] %vm348, %v925
    %929 = vrot.lane.b32.xlu0 %v920, 16
    %v930 = vpop.permute.xlu0 %929
    %932 = vst.msk [vmem:[%s921] sm:$0x3] %vm354, %v930
    %v933 = vcvt.s32.f32 %v913
    %934 = vst.msk [vmem:[%s921] sm:$0x3] %vm357, %v933
    %s935 = scalar_lea.vmem %s1, 6
    %v936 = vld [vmem:[%s935] sm:$0x3]
    %937 = vmatprep.subr.mxu0 0.0
    %938 = vmatpush1.msra.mxu0 %v37
    %939 = vmatprep.subr.mxu0 0.0
    %940 = vmatpush1.msra.mxu0 %v38
    %941 = vmatprep.subr.mxu0 0.0
    %942 = vmatpush1.msra.mxu0 %v39
    %943 = vmatprep.subr.mxu0 0.0
    %944 = vmatpush1.msra.mxu0 %v40
    %945 = vmatprep.subr.mxu0 0.0
    %946 = vmatpush1.msra.mxu0 0.0
    %947 = vmatprep.subr.mxu0 0.0
    %948 = vmatpush1.msra.mxu0 0.0
    %949 = vmatprep.subr.mxu0 0.0
    %950 = vmatpush1.msra.mxu0 0.0
    %951 = vmatprep.subr.mxu0 0.0
    %952 = vmatpush1.msra.mxu0 0.0
    %953 = vmatprep.subr.mxu0 0.0
    %954 = vmatpush1.msra.mxu0 0.0
    %955 = vmatprep.subr.mxu0 0.0
    %956 = vmatpush1.msra.mxu0 0.0
    %957 = vmatprep.subr.mxu0 0.0
    %958 = vmatpush1.msra.mxu0 0.0
    %959 = vmatprep.subr.mxu0 0.0
    %960 = vmatpush1.msra.mxu0 0.0
    %961 = vmatprep.subr.mxu0 0.0
    %962 = vmatpush1.msra.mxu0 0.0
    %963 = vmatprep.subr.mxu0 0.0
    %964 = vmatpush1.msra.mxu0 0.0
    %965 = vmatprep.subr.mxu0 0.0
    %966 = vmatpush1.msra.mxu0 0.0
    %967 = vmatprep.subr.mxu0 0.0
    %968 = vmatpush1.msra.mxu0 0.0
    %969 = vmatprep.subr.mxu0 0.0
    %970 = vmatpush1.msra.mxu0 0.0
    %971 = vmatprep.subr.mxu0 0.0
    %972 = vmatpush1.msra.mxu0 0.0
    %973 = vmatprep.subr.mxu0 0.0
    %974 = vmatpush1.msra.mxu0 0.0
    %975 = vmatprep.subr.mxu0 0.0
    %976 = vmatpush1.msra.mxu0 0.0
    %977 = vmatprep.subr.mxu0 0.0
    %978 = vmatpush1.msra.mxu0 0.0
    %979 = vmatprep.subr.mxu0 0.0
    %980 = vmatpush1.msra.mxu0 0.0
    %981 = vmatprep.subr.mxu0 0.0
    %982 = vmatpush1.msra.mxu0 0.0
    %983 = vmatprep.subr.mxu0 0.0
    %984 = vmatpush1.msra.mxu0 0.0
    %985 = vmatprep.subr.mxu0 0.0
    %986 = vmatpush1.msra.mxu0 0.0
    %987 = vmatprep.subr.mxu0 0.0
    %988 = vmatpush1.msra.mxu0 0.0
    %989 = vmatprep.subr.mxu0 0.0
    %990 = vmatpush1.msra.mxu0 0.0
    %991 = vmatprep.subr.mxu0 0.0
    %992 = vmatpush1.msra.mxu0 0.0
    %993 = vmatprep.subr.mxu0 0.0
    %994 = vmatpush1.msra.mxu0 0.0
    %995 = vmatprep.subr.mxu0 0.0
    %996 = vmatpush1.msra.mxu0 0.0
    %997 = vmatprep.subr.mxu0 0.0
    %998 = vmatpush1.msra.mxu0 0.0
    %999 = vmatprep.subr.mxu0 0.0
    %1000 = vmatpush1.msra.mxu0 0.0
    %1001 = vmatprep.mubr.f32.mxu0 0.0
    %1002 = vmatmul.mubr.f32.gmra.mrb[0].mxu0 %v747
    %v1003 = vpop.f32.mrb[0].mxu0
    %v1004 = vadd.f32 0.0, %v1003
    %v1005 = vpop.f32.mrb[0].mxu0
    %1006 = vdwg.mxu0
    %v1007 = vadd.f32 %v936, %v1004
    %v1008 = vxor.u32 %v1007, 2147483648
    %v1009 = vmul.f32 %v1008, 1.442695
    %v1010 = vpow.pop %v1009
    %v1011 = vadd.f32 %v1010, 1.0
    %v1012 = vrcp.pop %v1011
    %v1013 = vmul.f32 1.0, %v1012
    %v1014 = vtanh.pop %v1007
    %v1015 = vmul.f32 %v1013, %v737
    %1017 = vrot.lane.b32.xlu0 %v1014, 64
    %v1018 = vpop.permute.xlu0 %1017
    %v1020 = vmul.f32 %v1013, %v1018
    %1022 = vrot.lane.b32.xlu0 %v1020, 32
    %v1023 = vpop.permute.xlu0 %1022
    %v1025 = vadd.f32 %v1015, %v1023
    %v1026 = vtanh.pop %v1025
    %1028 = vrot.lane.b32.xlu0 %v1026, 64
    %v1029 = vpop.permute.xlu0 %1028
    %v1031 = vmul.f32 %v1013, %v1029
    %1033 = vrot.lane.b32.xlu0 %v1031, 32
    %v1034 = vpop.permute.xlu0 %1033
    %v1035 = vsel %vm54, %v1034, 0
    %1037 = vmatprep.subr.mxu0 0.0
    %1038 = vmatpush1.msra.mxu0 %v41
    %1039 = vmatprep.subr.mxu0 0.0
    %1040 = vmatpush1.msra.mxu0 %v42
    %1041 = vmatprep.subr.mxu0 0.0
    %1042 = vmatpush1.msra.mxu0 %v43
    %1043 = vmatprep.subr.mxu0 0.0
    %1044 = vmatpush1.msra.mxu0 %v44
    %1045 = vmatprep.subr.mxu0 0.0
    %1046 = vmatpush1.msra.mxu0 0.0
    %1047 = vmatprep.subr.mxu0 0.0
    %1048 = vmatpush1.msra.mxu0 0.0
    %1049 = vmatprep.subr.mxu0 0.0
    %1050 = vmatpush1.msra.mxu0 0.0
    %1051 = vmatprep.subr.mxu0 0.0
    %1052 = vmatpush1.msra.mxu0 0.0
    %1053 = vmatprep.subr.mxu0 0.0
    %1054 = vmatpush1.msra.mxu0 0.0
    %1055 = vmatprep.subr.mxu0 0.0
    %1056 = vmatpush1.msra.mxu0 0.0
    %1057 = vmatprep.subr.mxu0 0.0
    %1058 = vmatpush1.msra.mxu0 0.0
    %1059 = vmatprep.subr.mxu0 0.0
    %1060 = vmatpush1.msra.mxu0 0.0
    %1061 = vmatprep.subr.mxu0 0.0
    %1062 = vmatpush1.msra.mxu0 0.0
    %1063 = vmatprep.subr.mxu0 0.0
    %1064 = vmatpush1.msra.mxu0 0.0
    %1065 = vmatprep.subr.mxu0 0.0
    %1066 = vmatpush1.msra.mxu0 0.0
    %1067 = vmatprep.subr.mxu0 0.0
    %1068 = vmatpush1.msra.mxu0 0.0
    %1069 = vmatprep.subr.mxu0 0.0
    %1070 = vmatpush1.msra.mxu0 0.0
    %1071 = vmatprep.subr.mxu0 0.0
    %1072 = vmatpush1.msra.mxu0 0.0
    %1073 = vmatprep.subr.mxu0 0.0
    %1074 = vmatpush1.msra.mxu0 0.0
    %1075 = vmatprep.subr.mxu0 0.0
    %1076 = vmatpush1.msra.mxu0 0.0
    %1077 = vmatprep.subr.mxu0 0.0
    %1078 = vmatpush1.msra.mxu0 0.0
    %1079 = vmatprep.subr.mxu0 0.0
    %1080 = vmatpush1.msra.mxu0 0.0
    %1081 = vmatprep.subr.mxu0 0.0
    %1082 = vmatpush1.msra.mxu0 0.0
    %1083 = vmatprep.subr.mxu0 0.0
    %1084 = vmatpush1.msra.mxu0 0.0
    %1085 = vmatprep.subr.mxu0 0.0
    %1086 = vmatpush1.msra.mxu0 0.0
    %1087 = vmatprep.subr.mxu0 0.0
    %1088 = vmatpush1.msra.mxu0 0.0
    %1089 = vmatprep.subr.mxu0 0.0
    %1090 = vmatpush1.msra.mxu0 0.0
    %1091 = vmatprep.subr.mxu0 0.0
    %1092 = vmatpush1.msra.mxu0 0.0
    %1093 = vmatprep.subr.mxu0 0.0
    %1094 = vmatpush1.msra.mxu0 0.0
    %1095 = vmatprep.subr.mxu0 0.0
    %1096 = vmatpush1.msra.mxu0 0.0
    %1097 = vmatprep.subr.mxu0 0.0
    %1098 = vmatpush1.msra.mxu0 0.0
    %1099 = vmatprep.subr.mxu0 0.0
    %1100 = vmatpush1.msra.mxu0 0.0
    %1101 = vmatprep.mubr.f32.mxu0 0.0
    %1102 = vmatmul.mubr.f32.gmra.mrb[0].mxu0 %v1035
    %v1103 = vpop.f32.mrb[0].mxu0
    %v1104 = vadd.f32 %v160, %v1103
    %v1105 = vpop.f32.mrb[0].mxu0
    %1106 = vdwg.mxu0
    %s1107 = scalar_lea.vmem %s0, 48
    %v1108 = vld [vmem:[%s1107] sm:$0xff]
    %v1109 = vld [vmem:[%s1107 + $0x8] sm:$0xff]
    %v1112 = vunpack.c.l.s4 1966171168
    %v1113 = vunpack.c.0.s8 %v1112
    %v1114 = vlaneseq
    %v1115 = vshrl.u32 %v1114, 7
    %v1116 = vsub.s32 %v1113, %v1115
    %v1117 = vrot.slane %v1104, %v1116
    %v1118 = vcombine.high %v1117, %v1117
    %v1120 = vunpack.c.l.s4 1966171168
    %v1121 = vunpack.c.0.s8 %v1120
    %v1122 = vlaneseq
    %v1123 = vshrl.u32 %v1122, 7
    %v1124 = vsub.s32 %v1121, %v1123
    %v1125 = vrot.slane %v1117, %v1124
    %v1127 = vunpack.c.l.s4 1966171168
    %v1128 = vunpack.c.0.s8 %v1127
    %v1129 = vlaneseq
    %v1130 = vshrl.u32 %v1129, 7
    %v1131 = vsub.s32 %v1128, %v1130
    %v1132 = vrot.slane %v1118, %v1131
    %v1133 = vlaneseq
    %v1134 = vshrl.u32 %v1133, 7
    %v1135 = vsub.s32 0, %v1134
    %v1136 = vrot.slane %v1125, %v1135
    %v1137 = vlaneseq
    %v1138 = vshrl.u32 %v1137, 7
    %v1139 = vsub.s32 0, %v1138
    %v1140 = vrot.slane %v1132, %v1139
    %v1143 = vadd.f32 %v1108, %v1136
    %v1144 = vadd.f32 %v1109, %v1140
    %v1145 = vtanh.pop %v1143
    %v1146 = vtanh.pop %v1144
    %v1147 = vmul.f32 %v1145, %v278
    %v1148 = vmul.f32 %v1146, %v278
    %v1149 = vsel %vm54, %v1147, 0.0
    %1150 = vadd.xlane.f32.xlu0 %v1149
    %v1151 = vpop.xlane.xlu0 %1150
    %v1152 = vsel %vm54, %v1148, 0.0
    %1153 = vadd.xlane.f32.xlu0 %v1152
    %v1154 = vpop.xlane.xlu0 %1153
    %s1155 = scalar_lea.vmem %s3, 6
    %v1156 = vld [vmem:[%s1155] sm:$0x3]
    %vm1157 = vcmp.ne.f32.partialorder %v1156, 0.0
    %v1160 = vlaneseq
    %v1161 = vshrl.u32 %v1160, 7
    %v1162 = vsub.s32 %v292, %v1161
    %v1163 = vrot.slane %v1151, %v1162
    %v1164 = vlaneseq
    %v1165 = vshrl.u32 %v1164, 7
    %v1166 = vsub.s32 %v292, %v1165
    %v1167 = vrot.slane %v1154, %v1166
    %v1168 = vsel %vm301, %v1167, %v1163
    %v1170 = vsel %vm1157, %v1168, -100000.0
    %v1171 = vsel %vm305, %v1170, -inf
    %1172 = vmax.xlane.f32.xlu0 %v1171
    %v1173 = vpop.xlane.xlu0 %1172
    %v1174 = vsub.f32 %v1170, %v1173
    %v1175 = vmul.f32 %v1174, 1.442695
    %v1176 = vpow.pop %v1175
    %v1177 = vsel %vm305, %v1176, 0.0
    %1178 = vadd.xlane.f32.xlu0 %v1177
    %v1179 = vpop.xlane.xlu0 %1178
    %v1180 = vlog2.pop %v1179
    %v1181 = vmul.f32 %v1180, 0.6931472
    %v1182 = vsub.f32 %v1174, %v1181
    %v1183 = vmul.f32 %v1182, 1.442695
    %v1184 = vpow.pop %v1183
    %vm1185 = vcmp.eq.f32.partialorder %v1170, %v1173
    %v1186 = vsel %vm1185, %v292, 8
    %v1187 = vsel %vm305, %v1186, 2147483647
    %v1188 = vand.u32 %v1187, 65535
    %v1189 = vshra.s32 %v1187, 16
    %v1190 = vcvt.s32.f32 %v1188
    %v1191 = vcvt.s32.f32 %v1189
    %1192 = vmin.xlane.f32.xlu0 %v1191
    %v1193 = vpop.xlane.xlu0 %1192
    %vm1194 = vcmp.eq.f32.partialorder %v1191, %v1193
    %v1195 = vsel %vm1194, %v1190, inf
    %1196 = vmin.xlane.f32.xlu0 %v1195
    %v1197 = vpop.xlane.xlu0 %1196
    %v1198 = vcvt.f32.s32 %v1197
    %v1199 = vcvt.f32.s32 %v1193
    %v1200 = vshll.u32 %v1199, 16
    %v1201 = vadd.s32 %v1200, %v1198
    %v1202 = vsel %vm305, %v1182, -inf
    %1203 = vmax.xlane.f32.xlu0 %v1202
    %v1204 = vpop.xlane.xlu0 %1203
    %s1205 = scalar_lea.vmem %s2, 6
    %v1206 = vld [vmem:[%s1205] sm:$0x3]
    %v1207 = vsub.f32 1.0, %v1206
    %v1208 = vmul.f32 %v1204, %v1207
    %s1209 = scalar_lea.vmem %s9, 6
    %1210 = vst.msk [vmem:[%s1209] sm:$0x3] %vm305, %v1168
    %1212 = vrot.lane.b32.xlu0 %v1184, 8
    %v1213 = vpop.permute.xlu0 %1212
    %1215 = vst.msk [vmem:[%s1209] sm:$0x3] %vm348, %v1213
    %1217 = vrot.lane.b32.xlu0 %v1208, 16
    %v1218 = vpop.permute.xlu0 %1217
    %1220 = vst.msk [vmem:[%s1209] sm:$0x3] %vm354, %v1218
    %v1221 = vcvt.s32.f32 %v1201
    %1222 = vst.msk [vmem:[%s1209] sm:$0x3] %vm357, %v1221
    %vm1224 = vcmask 254976
    %1225 = vst.msk [vmem:[#allocation2] sm:$0x3] %vm1224, %v1034
    %1227 = vrot.lane.b32.xlu0 %v1025, 96
    %v1228 = vpop.permute.xlu0 %1227
    %1230 = vst.msk [vmem:[#allocation4] sm:$0x3] %vm1224, %v1228
    // Predicated region
    $region38: #{decoder_rollout.1} parent=1 // pred_check
      _
    $region39: #{decoder_rollout.1} parent=1 // pred_check_branch
      %1232 = sbr.rel (0) target = $region41
    $region40: #{decoder_rollout.1} parent=1 // pred_region
      _
    $region41: #{decoder_rollout.1} parent=1 // pred_fallthru
      _
    // Predicated region
    $region42: #{decoder_rollout.1} parent=1 // pred_check
      _
    $region43: #{decoder_rollout.1} parent=1 // pred_check_branch
      %1234 = sbr.rel (0) target = $region45
    $region44: #{decoder_rollout.1} parent=1 // pred_region
      %s1236 = ssub.s32 32, 32
      %1237 = vsyncadd [#allocation3], %s1236
      %s1239 = sshll.u32 [#allocation2], 4
      %s1240 = int_to_ptr.vmem [resolvable:$true] %s1239
      %1242 = dma.vmem_to_hbm [thread:$0]  %s1240, 32, %s10, [#allocation3]
    $region45: #{decoder_rollout.1} parent=1 // pred_fallthru
      _
    // Predicated region
    $region46: #{decoder_rollout.1} parent=1 // pred_check
      _
    $region47: #{decoder_rollout.1} parent=1 // pred_check_branch
      %1244 = sbr.rel (0) target = $region49
    $region48: #{decoder_rollout.1} parent=1 // pred_region
      %s1246 = ssub.s32 32, 32
      %1247 = vsyncadd [#allocation5], %s1246
      %s1249 = sshll.u32 [#allocation4], 4
      %s1250 = int_to_ptr.vmem [resolvable:$true] %s1249
      %1252 = dma.vmem_to_hbm [thread:$0]  %s1250, 32, %s11, [#allocation5]
    $region49: #{decoder_rollout.1} parent=1 // pred_fallthru
      _
    // Predicated region
    $region50: #{decoder_rollout.1} parent=1 // pred_check
      _
    $region51: #{decoder_rollout.1} parent=1 // pred_check_branch
      %1254 = sbr.rel (0) target = $region53
    $region52: #{decoder_rollout.1} parent=1 // pred_region
      _
    $region53: #{decoder_rollout.1} parent=1 // pred_fallthru
      _
    // Predicated region
    $region54: #{decoder_rollout.1} parent=1 // pred_check
      _
    $region55: #{decoder_rollout.1} parent=1 // pred_check_branch
      %1256 = sbr.rel (0) target = $region57
    $region56: #{decoder_rollout.1} parent=1 // pred_region
      %1257 = dma.done [#allocation3], 32
    $region57: #{decoder_rollout.1} parent=1 // pred_fallthru
      _
    // Predicated region
    $region58: #{decoder_rollout.1} parent=1 // pred_check
      _
    $region59: #{decoder_rollout.1} parent=1 // pred_check_branch
      %1259 = sbr.rel (0) target = $region61
    $region60: #{decoder_rollout.1} parent=1 // pred_region
      %1260 = dma.done [#allocation5], 32
    $region61: #{decoder_rollout.1} parent=1 // pred_fallthru
      _
    %1261 = vsyncpa [#allocation3], 1
    %1262 = vsyncpa [#allocation5], 1

</llo_original>
